<compile_context>
chip_gen: v7x
topology: tpu7x:2x2x1
jax: 0.10.0
libtpu: 0.0.40
codegen_flags: <defaults>
</compile_context>

<pallas_src>
import functools

import numpy as np
import jax
import jax.numpy as jnp
from jax.experimental import pallas as pl
from jax.experimental.pallas import tpu as pltpu

EPS = 1e-5
ACT_DTYPE = jnp.bfloat16            # activation / weight dtype fed to the MXU
VMEM_LIMIT = 32 * 1024 * 1024       # safe on v5e/v6e/v7x scoped budgets


def _round_up(x, m):
    return ((x + m - 1) // m) * m


def _choose_tile_m(M):
    """Largest row tile (<=1024) that divides M exactly so no pad / slice HBM
    copies are needed; fall back to padding to a multiple of 256."""
    for tm in (1024, 512, 256, 128, 64, 32, 16, 8):
        if M % tm == 0:
            return tm, M
    return 256, _round_up(M, 256)


# ----------------------------------------------------------------------------
# Pallas kernels
# ----------------------------------------------------------------------------
def _matmul_bias_kernel(x_ref, w_ref, b_ref, o_ref, *, relu):
    acc = jnp.dot(x_ref[...], w_ref[...], preferred_element_type=jnp.float32)
    y = acc + b_ref[...]
    if relu:
        y = jnp.maximum(y, 0.0)
    o_ref[...] = y.astype(o_ref.dtype)


def _add_matmul_bias_kernel(x1_ref, x2_ref, w_ref, b_ref, o_ref, *, relu):
    x = x1_ref[...] + x2_ref[...]
    acc = jnp.dot(x, w_ref[...], preferred_element_type=jnp.float32)
    y = acc + b_ref[...]
    if relu:
        y = jnp.maximum(y, 0.0)
    o_ref[...] = y.astype(o_ref.dtype)


def _pointwise_matmul(xs, w, bias, relu, out_dtype):
    """(optional add) + 1x1 conv (BN scale pre-folded into w) + bias + ReLU.
    Activations / weights bf16, f32 MXU accumulation, f32 bias."""
    N, H, W, Cin = xs[0].shape
    Cout = w.shape[1]
    M = N * H * W
    TM, Mp = _choose_tile_m(M)
    flats = []
    for x in xs:
        x2 = x.reshape(M, Cin)
        if Mp != M:
            x2 = jnp.pad(x2, ((0, Mp - M), (0, 0)))
        flats.append(x2)
    kern = _matmul_bias_kernel if len(xs) == 1 else _add_matmul_bias_kernel
    x_specs = [pl.BlockSpec((TM, Cin), lambda i: (i, 0)) for _ in xs]
    out = pl.pallas_call(
        functools.partial(kern, relu=relu),
        grid=(Mp // TM,),
        in_specs=x_specs + [
            pl.BlockSpec((Cin, Cout), lambda i: (0, 0)),
            pl.BlockSpec((1, Cout), lambda i: (0, 0)),
        ],
        out_specs=pl.BlockSpec((TM, Cout), lambda i: (i, 0)),
        out_shape=jax.ShapeDtypeStruct((Mp, Cout), out_dtype),
        compiler_params=pltpu.CompilerParams(
            dimension_semantics=("parallel",),
            vmem_limit_bytes=VMEM_LIMIT),
    )(*flats, w, bias)
    if Mp != M:
        out = out[:M]
    return out.reshape(N, H, W, Cout)


def conv1x1_bias_act(x, w, bias, relu=True, out_dtype=ACT_DTYPE):
    return _pointwise_matmul([x], w, bias, relu, out_dtype)


def add_conv1x1_bias_act(x1, x2, w, bias, relu=True, out_dtype=ACT_DTYPE):
    return _pointwise_matmul([x1, x2], w, bias, relu, out_dtype)


def _upsample_kernel(xp_ref, o_ref, *, f, H, W):
    """Depthwise ConvTranspose2d(kernel=2f, stride=f, pad=f//2, groups=C) with
    the fixed bilinear weights produced by fill_up_weights.  One batch element
    per grid step; output phases (py, px) are written phase-major and
    re-interleaved to (N, f*H, f*W, C) in glue."""
    K = 2 * f
    pad = f // 2
    c = (2 * f - 1 - f % 2) / (2.0 * f)
    w1d = [1.0 - abs(i / f - c) for i in range(K)]      # compile-time scalars

    windows = {}                                        # hoisted (dy,dx) loads

    def window(dy, dx):
        if (dy, dx) not in windows:
            windows[(dy, dx)] = xp_ref[0, 1 + dy:1 + dy + H,
                                       1 + dx:1 + dx + W, :].astype(jnp.float32)
        return windows[(dy, dx)]

    for py in range(f):
        ky0 = (py + pad) % f
        dy0 = (py + pad - ky0) // f
        for px in range(f):
            kx0 = (px + pad) % f
            dx0 = (px + pad - kx0) // f
            acc = None
            for a in range(2):
                ky = ky0 + a * f
                dy = dy0 - a
                for b in range(2):
                    kx = kx0 + b * f
                    dx = dx0 - b
                    wgt = float(w1d[ky] * w1d[kx])
                    term = wgt * window(dy, dx)
                    acc = term if acc is None else acc + term
            o_ref[0, py, px] = acc.astype(o_ref.dtype)


def upsample_bilinear_depthwise(x, f):
    if f == 1:
        return x
    assert f % 2 == 0, "output-size formula assumes even up factor"
    N, H, W, C = x.shape
    xp = jnp.pad(x, ((0, 0), (1, 1), (1, 1), (0, 0)))   # zero-pad = OOB taps
    out = pl.pallas_call(
        functools.partial(_upsample_kernel, f=f, H=H, W=W),
        grid=(N,),
        in_specs=[pl.BlockSpec((1, H + 2, W + 2, C), lambda n: (n, 0, 0, 0))],
        out_specs=pl.BlockSpec((1, f, f, H, W, C),
                               lambda n: (n, 0, 0, 0, 0, 0)),
        out_shape=jax.ShapeDtypeStruct((N, f, f, H, W, C), x.dtype),
        compiler_params=pltpu.CompilerParams(
            dimension_semantics=("parallel",),
            vmem_limit_bytes=VMEM_LIMIT),
    )(xp)
    # TODO(synk): writing the interleaved (N,H,f,W,f,C) layout directly from
    # the kernel would save this XLA transpose but needs sublane-strided
    # stores; kept in glue for robustness.
    out = out.transpose(0, 3, 1, 4, 2, 5)               # (N, H, f, W, f, C)
    return out.reshape(N, f * H, f * W, C)


def conv3x3_bias_act(x, w4d, bias, relu=True, out_dtype=ACT_DTYPE):
    """3x3 conv (pad=1) + bias + optional ReLU.  im2col is layout glue; the
    matmul runs in the fused Pallas 1x1 kernel."""
    # TODO(synk): a fully in-kernel 3x3 conv (9 shifted jnp.dot on a padded
    # VMEM block) would avoid materializing the 9x im2col tensor in HBM.
    N, H, W, Cin = x.shape
    Cout = w4d.shape[-1]
    xp = jnp.pad(x, ((0, 0), (1, 1), (1, 1), (0, 0)))
    cols = [xp[:, dy:dy + H, dx:dx + W, :] for dy in range(3) for dx in range(3)]
    xcol = jnp.concatenate(cols, axis=-1)               # (N,H,W,9*Cin)
    w2 = w4d.reshape(9 * Cin, Cout)                     # (dy,dx,c) order matches
    return conv1x1_bias_act(xcol, w2, bias, relu=relu, out_dtype=out_dtype)


# ----------------------------------------------------------------------------
# Parameter init (deterministic, synthetic) and module structure
# ----------------------------------------------------------------------------
class KeyGen:
    def __init__(self, seed=0):
        self.key = jax.random.PRNGKey(seed)

    def __call__(self):
        self.key, k = jax.random.split(self.key)
        return k


def init_conv_node(kg, chi, cho):
    """Conv module: 1x1 conv (no bias) + BatchNorm2d (eval) + ReLU.
    BN scale is folded into the weight columns; only bias remains separate."""
    w = jax.random.normal(kg(), (chi, cho), jnp.float32) / np.sqrt(chi)
    gamma = 1.0 + 0.1 * jax.random.normal(kg(), (cho,), jnp.float32)
    beta = 0.1 * jax.random.normal(kg(), (cho,), jnp.float32)
    mean = 0.1 * jax.random.normal(kg(), (cho,), jnp.float32)
    var = 1.0 + 0.1 * jnp.abs(jax.random.normal(kg(), (cho,), jnp.float32))
    scale = gamma / jnp.sqrt(var + EPS)
    bias = beta - mean * scale
    w_folded = (w * scale[None, :]).astype(ACT_DTYPE)
    return {'w': w_folded, 'bias': bias.reshape(1, cho).astype(jnp.float32)}


def conv_node_fwd(p, x):
    return conv1x1_bias_act(x, p['w'], p['bias'], relu=True)


def conv_node_fwd_add(p, x1, x2):
    return add_conv1x1_bias_act(x1, x2, p['w'], p['bias'], relu=True)


class IDAUp:
    def __init__(self, kg, o, channels, up_f):
        self.proj = {}
        self.node = {}
        self.up_f = {}
        for i in range(1, len(channels)):
            c = int(channels[i])
            f = int(up_f[i])
            self.proj[i] = init_conv_node(kg, c, o)
            self.node[i] = init_conv_node(kg, o, o)
            self.up_f[i] = f

    def __call__(self, layers, startp, endp):
        for i in range(startp + 1, endp):
            k = i - startp
            layers[i] = upsample_bilinear_depthwise(
                conv_node_fwd(self.proj[k], layers[i]), self.up_f[k])
            layers[i] = conv_node_fwd_add(self.node[k], layers[i], layers[i - 1])


class DLAUp:
    def __init__(self, kg, startp, channels, scales, in_channels=None):
        self.startp = startp
        if in_channels is None:
            in_channels = channels
        self.channels = channels
        channels = list(channels)
        scales = np.array(scales, dtype=int)
        self.ida = {}
        for i in range(len(channels) - 1):
            j = -i - 2
            self.ida[i] = IDAUp(kg, channels[j], in_channels[j:],
                                list(scales[j:] // scales[j]))
            scales[j + 1:] = scales[j]
            in_channels[j + 1:] = [channels[j] for _ in channels[j + 1:]]

    def __call__(self, layers):
        out = [layers[-1]]
        for i in range(len(layers) - self.startp - 1):
            self.ida[i](layers, len(layers) - i - 2, len(layers))
            out.insert(0, layers[-1])
        return out


class DLASeg:
    def __init__(self, kg, heads, head_convs, channels):
        down_ratio = 4
        self.first_level = int(np.log2(down_ratio))     # 2
        self.last_level = 5
        self.channels = list(channels)

        # TODO(synk): dla34 base backbone not in snippet; approximated by a
        # strided-subsample + 1x1 conv/BN/ReLU stem producing the 6-level pyramid.
        self.base_in_ch = 16  # 3+3+3+3+1 = 13, zero-padded to 16 lanes
        self.base_params = [init_conv_node(kg, self.base_in_ch, c)
                            for c in self.channels]

        scales = [2 ** i for i in range(len(self.channels[self.first_level:]))]
        self.dla_up = DLAUp(kg, self.first_level,
                            list(self.channels[self.first_level:]), scales)
        out_channel = self.channels[self.first_level]
        self.ida_up = IDAUp(kg, out_channel,
                            self.channels[self.first_level:self.last_level],
                            [2 ** i for i in range(self.last_level - self.first_level)])

        # TODO(synk): BaseModel head definitions not in snippet; standard
        # CenterNet heads (3x3 conv + ReLU + 1x1 conv with bias), fused across
        # all heads into two lane-dense Pallas matmuls.
        self.head_names = list(heads.keys())
        self.head_classes = [int(heads[h]) for h in self.head_names]
        hcs = [int(head_convs[h][0]) for h in self.head_names]
        total_hc = sum(hcs)
        total_hc_p = max(128, _round_up(total_hc, 128))  # lane-dense hidden
        total_cls = sum(self.head_classes)

        w3 = jax.random.normal(kg(), (3, 3, out_channel, total_hc), jnp.float32) \
            / np.sqrt(9 * out_channel)
        w3 = jnp.pad(w3, ((0, 0), (0, 0), (0, 0), (0, total_hc_p - total_hc)))
        b3 = jnp.zeros((1, total_hc_p), jnp.float32)

        w1 = np.zeros((total_hc_p, total_cls), np.float32)  # block-diagonal
        b1 = np.zeros((total_cls,), np.float32)
        r0, c0 = 0, 0
        for name, hc, cls in zip(self.head_names, hcs, self.head_classes):
            blk = np.asarray(jax.random.normal(kg(), (hc, cls), jnp.float32)) \
                / np.sqrt(hc)
            w1[r0:r0 + hc, c0:c0 + cls] = blk
            if name == 'hm':
                b1[c0:c0 + cls] = -2.19
            r0 += hc
            c0 += cls

        self.w3 = w3.astype(ACT_DTYPE)                   # (3,3,oc,total_hc_p)
        self.b3 = b3
        self.w1 = jnp.asarray(w1, ACT_DTYPE)
        self.b1 = jnp.asarray(b1, jnp.float32).reshape(1, total_cls)

    def base(self, vi, ir, pre_vi, pre_ir, pre_hm):
        x = jnp.concatenate([vi, ir, pre_vi, pre_ir, pre_hm], axis=-1)
        pad_c = self.base_in_ch - x.shape[-1]
        x = jnp.pad(x, ((0, 0), (0, 0), (0, 0), (0, pad_c))).astype(ACT_DTYPE)
        layers = []
        for lvl, p in enumerate(self.base_params):
            s = 2 ** lvl
            layers.append(conv_node_fwd(p, x[:, ::s, ::s, :]))
        return layers

    def __call__(self, vi, ir, pre_vi, pre_ir, pre_hm):
        x = self.base(vi, ir, pre_vi, pre_ir, pre_hm)
        x = self.dla_up(x)
        y = []
        for i in range(self.last_level - self.first_level):
            y.append(x[i])
        self.ida_up(y, 0, len(y))
        feat = y[-1]

        # fused heads: one im2col + one 3x3 matmul + one block-diag 1x1 matmul
        h = conv3x3_bias_act(feat, self.w3, self.b3, relu=True)
        o = conv1x1_bias_act(h, self.w1, self.b1, relu=False,
                             out_dtype=jnp.float32)
        out = {}
        c0 = 0
        for name, cls in zip(self.head_names, self.head_classes):
            out[name] = o[..., c0:c0 + cls]
            c0 += cls
        return [out]


class CenterTrackRGBT:
    def __init__(self, kg, heads, head_convs, modal='RGB-T',
                 channels=(4, 8, 16, 32, 64, 128)):
        self.modal = modal
        self.dlaseg = DLASeg(kg, heads, head_convs, channels)

    def __call__(self, img_rgb=None, img_t=None, pre_img_rgb=None,
                 pre_img_t=None, pre_hm=None):
        if self.modal == 'RGB-T':
            return self.dlaseg(img_rgb, img_t, pre_img_rgb, pre_img_t, pre_hm)
        # TODO(synk): 'visible'/'infrared' modal paths use a different base
        # signature of the (missing) dla34 backbone; only 'RGB-T' implemented.
        raise NotImplementedError(self.modal)


# ----------------------------------------------------------------------------
if __name__ == "__main__":
    key = jax.random.PRNGKey(0)
    k1, k2, k3, k4, k5 = jax.random.split(key, 5)

    N, H, W = 2, 64, 64     # NHWC (PyTorch NCHW [2,3,64,64] etc.)
    img_rgb = jax.random.normal(k1, (N, H, W, 3), jnp.float32)
    img_t = jax.random.normal(k2, (N, H, W, 3), jnp.float32)
    pre_img_rgb = jax.random.normal(k3, (N, H, W, 3), jnp.float32)
    pre_img_t = jax.random.normal(k4, (N, H, W, 3), jnp.float32)
    pre_hm = jax.random.normal(k5, (N, H, W, 1), jnp.float32)

    heads = {'hm': 1, 'reg': 2, 'wh': 2}
    head_convs = {'hm': [32], 'reg': [32], 'wh': [32]}

    model = CenterTrackRGBT(KeyGen(42), heads, head_convs, modal='RGB-T')
    z = model(img_rgb, img_t, pre_img_rgb, pre_img_t, pre_hm)

    for leaf in jax.tree_util.tree_leaves(z):
        jax.block_until_ready(leaf)
    # sanity: one output dict, heatmap at (N, H/4, W/4, 1)
    assert z[0]['hm'].shape == (N, H // 4, W // 4, 1)
    assert z[0]['reg'].shape == (N, H // 4, W // 4, 2)
    assert z[0]['wh'].shape == (N, H // 4, W // 4, 2)
    assert z[0]['hm'].dtype == jnp.float32
    print("KERNEL_OK")
</pallas_src>

<mosaic_0001>
module attributes {stable_mosaic.version = 11 : i64} {
  func.func @_matmul_bias_kernel(%arg0: i32, %arg1: memref<1024x16xbf16, #tpu.memory_space<vmem>>, %arg2: memref<16x4xbf16, #tpu.memory_space<vmem>>, %arg3: memref<1x4xf32, #tpu.memory_space<vmem>>, %arg4: memref<1024x4xbf16, #tpu.memory_space<vmem>>) attributes {dimension_semantics = [#tpu.dimension_semantics<parallel>], iteration_bounds = array<i64: 8>, scalar_prefetch = 0 : i64, scratch_operands = 0 : i64, tpu.core_type = #tpu.core_type<tc>, window_params = [{transform_indices = @transform_0, window_bounds = array<i64: 1024, 16>}, {pipeline_mode = #tpu.pipeline_mode<synchronous>, transform_indices = @transform_1, window_bounds = array<i64: 16, 4>}, {pipeline_mode = #tpu.pipeline_mode<synchronous>, transform_indices = @transform_2, window_bounds = array<i64: 1, 4>}, {transform_indices = @transform_3, window_bounds = array<i64: 1024, 4>}]} {
    %c0 = arith.constant 0 : index
    %c0_0 = arith.constant 0 : index
    %0 = vector.load %arg1[%c0, %c0_0] : memref<1024x16xbf16, #tpu.memory_space<vmem>>, vector<1024x16xbf16>
    %c0_1 = arith.constant 0 : index
    %c0_2 = arith.constant 0 : index
    %1 = vector.load %arg2[%c0_1, %c0_2] : memref<16x4xbf16, #tpu.memory_space<vmem>>, vector<16x4xbf16>
    %cst = arith.constant dense<0.000000e+00> : vector<1024x4xf32>
    %2 = tpu.matmul %0, %1, %cst {dimension_numbers = #tpu.dot_dimension_numbers<[1], [0], [0], [1], [0, 0, 1, 1], [], []>} : vector<1024x16xbf16>, vector<16x4xbf16>, vector<1024x4xf32> -> vector<1024x4xf32>
    %c0_3 = arith.constant 0 : index
    %c0_4 = arith.constant 0 : index
    %3 = vector.load %arg3[%c0_3, %c0_4] : memref<1x4xf32, #tpu.memory_space<vmem>>, vector<1x4xf32>
    %4 = vector.broadcast %3 : vector<1x4xf32> to vector<1024x4xf32>
    %5 = arith.addf %2, %4 : vector<1024x4xf32>
    %cst_5 = arith.constant 0.000000e+00 : f32
    %6 = vector.broadcast %cst_5 : f32 to vector<1024x4xf32>
    %7 = arith.maximumf %5, %6 : vector<1024x4xf32>
    %8 = arith.truncf %7 : vector<1024x4xf32> to vector<1024x4xbf16>
    %c0_6 = arith.constant 0 : index
    %c0_7 = arith.constant 0 : index
    %9 = vector.load %arg4[%c0_6, %c0_7] : memref<1024x4xbf16, #tpu.memory_space<vmem>>, vector<1024x4xbf16>
    tpu.vector_store %arg4[%c0_6, %c0_7], %8 {strides = array<i32>} : memref<1024x4xbf16, #tpu.memory_space<vmem>>, vector<1024x4xbf16>,
    return
  }
  func.func @transform_0(%arg0: i32) -> (i32, i32) {
    %c0_i32 = arith.constant 0 : i32
    %c0_i32_0 = arith.constant 0 : i32
    return %arg0, %c0_i32 : i32, i32
  }
  func.func @transform_1(%arg0: i32) -> (i32, i32) {
    %c0_i32 = arith.constant 0 : i32
    %c0_i32_0 = arith.constant 0 : i32
    %c0_i32_1 = arith.constant 0 : i32
    return %c0_i32, %c0_i32_0 : i32, i32
  }
  func.func @transform_2(%arg0: i32) -> (i32, i32) {
    %c0_i32 = arith.constant 0 : i32
    %c0_i32_0 = arith.constant 0 : i32
    %c0_i32_1 = arith.constant 0 : i32
    return %c0_i32, %c0_i32_0 : i32, i32
  }
  func.func @transform_3(%arg0: i32) -> (i32, i32) {
    %c0_i32 = arith.constant 0 : i32
    %c0_i32_0 = arith.constant 0 : i32
    return %arg0, %c0_i32 : i32, i32
  }
}

</mosaic_0001>

<llo_original>
// kernel: tpu_custom_call.1
$region0: #{tpu_custom_call.1}
  #allocation0 [shape = 'u32[]', space=smem, size = 0x4, offset = 0x4, fixed_abs, tag = 'smem constant byte address 0x4 - core index']
  #allocation1 [shape = 'u32[144,128]{1,0:T(1,128)}', space=vmem, size = 0x12000, scoped, tag = 'internal scratch']
  %s0 = inlined_call_operand.vmem [shape: bf16[8192,16], index: 0, kind: input, shape index: {}]
  %s1 = inlined_call_operand.vmem [shape: bf16[16,4], index: 1, kind: input, shape index: {}]
  %s2 = inlined_call_operand.vmem [shape: f32[1,4], index: 2, kind: input, shape index: {}]
  %s3 = inlined_call_operand.vmem [shape: bf16[8192,4], index: 3, kind: output, shape index: {}]
  %s4 = sld [smem:[#allocation0]]
  $region45: #{tpu_custom_call.1} parent=0
    _
  %s6 = ssub.s32 1, %s4
  %s7 = scalar_select 0, %s6, %s4
  loop: start=0, step=1, limit=10
  $region2: #{tpu_custom_call.1} parent=0 // loop_pre_header
    _
  $region3: #{tpu_custom_call.1} parent=0 // loop_header
    %s9 = sphi 0, %s13
    %p10 = scmp.ge.s32.totalorder %s9, 10
    %s19 = sphi 0, %s21
    %s22 = sphi 0, %s19
    %s23 = sphi 0, %s22
    %s39 = sphi 0, %s23
    %s43 = sphi 0, %s43
    %s45 = sphi 0, %s43
    %s46 = sphi 0, %s45
    %s60 = sphi 0, %s46
    %s64 = sphi 0, %s64
    %s66 = sphi 0, %s64
    %s67 = sphi 0, %s66
    %s81 = sphi 0, %s67
    %s87 = sphi 0, %s89
    %s90 = sphi 0, %s87
    %s91 = sphi 0, %s90
    %s107 = sphi 0, %s91
  $region4: #{tpu_custom_call.1} parent=0 // loop_header_branch
    %12 = sbr.rel (%p10) target = $region8
  $region5: #{tpu_custom_call.1} parent=0 // loop_body
    %s14 = ssub.s32 %s9, 1
    %s15 = ssub.s32 %s9, 2
    %s16 = sadd.s32 %s9, 1
    %s17 = ssub.s32 %s9, %s16
    %p18 = scmp.eq.s32.totalorder %s17, 0
    %s20 = sadd.s32 %s19, 1
    %s21 = scalar_select %p18, %s19, %s20
    %p24 = pneg %p18
    %p25 = scmp.eq.s32.totalorder %s9, 7
    %p26 = por %p24, %p25
    %p27 = scmp.ne.s32.totalorder %s19, %s22
    %p28 = scmp.eq.s32.totalorder %s9, 0
    %p29 = por %p27, %p28
    %p30 = scmp.ne.s32.totalorder %s19, %s22
    %p31 = scmp.eq.s32.totalorder %s14, 7
    %p32 = por %p30, %p31
    %p33 = scmp.ne.s32.totalorder %s22, %s23
    %p34 = scmp.eq.s32.totalorder %s14, 0
    %p35 = por %p33, %p34
    %p36 = scmp.ne.s32.totalorder %s22, %s23
    %p37 = scmp.eq.s32.totalorder %s15, 7
    %p38 = por %p36, %p37
    %p40 = scmp.ne.s32.totalorder %s23, %s39
    %p41 = scmp.eq.s32.totalorder %s15, 0
    %p42 = por %p40, %p41
    %s44 = sadd.s32 %s43, 1
    %p47 = scmp.eq.s32.totalorder %s9, 7
    %p48 = scmp.ne.s32.totalorder %s43, %s45
    %p49 = scmp.eq.s32.totalorder %s9, 0
    %p50 = por %p48, %p49
    %p51 = scmp.ne.s32.totalorder %s43, %s45
    %p52 = scmp.eq.s32.totalorder %s14, 7
    %p53 = por %p51, %p52
    %p54 = scmp.ne.s32.totalorder %s45, %s46
    %p55 = scmp.eq.s32.totalorder %s14, 0
    %p56 = por %p54, %p55
    %p57 = scmp.ne.s32.totalorder %s45, %s46
    %p58 = scmp.eq.s32.totalorder %s15, 7
    %p59 = por %p57, %p58
    %p61 = scmp.ne.s32.totalorder %s46, %s60
    %p62 = scmp.eq.s32.totalorder %s15, 0
    %p63 = por %p61, %p62
    %s65 = sadd.s32 %s64, 1
    %p68 = scmp.eq.s32.totalorder %s9, 7
    %p69 = scmp.ne.s32.totalorder %s64, %s66
    %p70 = scmp.eq.s32.totalorder %s9, 0
    %p71 = por %p69, %p70
    %p72 = scmp.ne.s32.totalorder %s64, %s66
    %p73 = scmp.eq.s32.totalorder %s14, 7
    %p74 = por %p72, %p73
    %p75 = scmp.ne.s32.totalorder %s66, %s67
    %p76 = scmp.eq.s32.totalorder %s14, 0
    %p77 = por %p75, %p76
    %p78 = scmp.ne.s32.totalorder %s66, %s67
    %p79 = scmp.eq.s32.totalorder %s15, 7
    %p80 = por %p78, %p79
    %p82 = scmp.ne.s32.totalorder %s67, %s81
    %p83 = scmp.eq.s32.totalorder %s15, 0
    %p84 = por %p82, %p83
    %s85 = ssub.s32 %s9, %s16
    %p86 = scmp.eq.s32.totalorder %s85, 0
    %s88 = sadd.s32 %s87, 1
    %s89 = scalar_select %p86, %s87, %s88
    %p92 = pneg %p86
    %p93 = scmp.eq.s32.totalorder %s9, 7
    %p94 = por %p92, %p93
    %p95 = scmp.ne.s32.totalorder %s87, %s90
    %p96 = scmp.eq.s32.totalorder %s9, 0
    %p97 = por %p95, %p96
    %p98 = scmp.ne.s32.totalorder %s87, %s90
    %p99 = scmp.eq.s32.totalorder %s14, 7
    %p100 = por %p98, %p99
    %p101 = scmp.ne.s32.totalorder %s90, %s91
    %p102 = scmp.eq.s32.totalorder %s14, 0
    %p103 = por %p101, %p102
    %p104 = scmp.ne.s32.totalorder %s90, %s91
    %p105 = scmp.eq.s32.totalorder %s15, 7
    %p106 = por %p104, %p105
    %p108 = scmp.ne.s32.totalorder %s91, %s107
    %p109 = scmp.eq.s32.totalorder %s15, 0
    %p110 = por %p108, %p109
    %p111 = scmp.le.s32.totalorder 1, %s9
    %p112 = scmp.lt.s32.totalorder %s9, 9
    %p113 = pnand %p111, %p112
    %p114 = pneg %p113
    // Predicated region
    $region9: #{tpu_custom_call.1} parent=5 // pred_check
      _
    $region10: #{tpu_custom_call.1} parent=5 // pred_check_branch
      %116 = sbr.rel (%p113) target = $region12
    $region11: #{tpu_custom_call.1} parent=5 // pred_region
      %s117 = ssub.s32 %s9, 1
      // Predicated region
      $region13: #{tpu_custom_call.1} parent=11 // pred_check
        %p118 = pneg %p56
      $region14: #{tpu_custom_call.1} parent=11 // pred_check_branch
        %120 = sbr.rel (%p118) target = $region16
      $region15: #{tpu_custom_call.1} parent=11 // pred_region
        _
      $region16: #{tpu_custom_call.1} parent=11 // pred_fallthru
        _
      // Predicated region
      $region17: #{tpu_custom_call.1} parent=11 // pred_check
        %p121 = pneg %p77
      $region18: #{tpu_custom_call.1} parent=11 // pred_check_branch
        %123 = sbr.rel (%p121) target = $region20
      $region19: #{tpu_custom_call.1} parent=11 // pred_region
        _
      $region20: #{tpu_custom_call.1} parent=11 // pred_fallthru
        _
    $region12: #{tpu_custom_call.1} parent=5 // pred_fallthru
      _
    %p124 = scmp.lt.s32.totalorder %s9, 8
    // Predicated region
    $region21: #{tpu_custom_call.1} parent=5 // pred_check
      %p125 = pneg %p124
    $region22: #{tpu_custom_call.1} parent=5 // pred_check_branch
      %127 = sbr.rel (%p125) target = $region24
    $region23: #{tpu_custom_call.1} parent=5 // pred_region
      // Predicated region
      $region25: #{tpu_custom_call.1} parent=23 // pred_check
        %p128 = pneg %p29
      $region26: #{tpu_custom_call.1} parent=23 // pred_check_branch
        %130 = sbr.rel (%p128) target = $region28
      $region27: #{tpu_custom_call.1} parent=23 // pred_region
        %s131 = smul.u32 128, %s9
        %p132 = scmp.lt.s32.totalorder %s131, 1023
        %s133 = scalar_select %p132, %s131, 1023
        %s134 = smul.addr %s133, 4
        %s135 = scalar_lea.vmem %s0, %s134
        %s136 = smul.u32 128, %s9
      $region28: #{tpu_custom_call.1} parent=23 // pred_fallthru
        _
    $region24: #{tpu_custom_call.1} parent=5 // pred_fallthru
      _
    %p137 = scmp.le.s32.totalorder 1, %s9
    %p138 = scmp.lt.s32.totalorder %s9, 9
    %p139 = pnand %p137, %p138
    %p140 = pneg %p139
    // Predicated region
    $region29: #{tpu_custom_call.1} parent=5 // pred_check
      _
    $region30: #{tpu_custom_call.1} parent=5 // pred_check_branch
      %142 = sbr.rel (%p139) target = $region32
    $region31: #{tpu_custom_call.1} parent=5 // pred_region
      %s143 = ssub.s32 %s9, 1
      %s144 = smul.u32 128, %s14
      %p145 = scmp.lt.s32.totalorder %s144, 1023
      %s146 = scalar_select %p145, %s144, 1023
      %s147 = smul.addr %s146, 4
      %s148 = scalar_lea.vmem %s0, %s147
      %p149 = pneg %p35
      %p150 = pneg %p32
      %p151 = pneg %p56
      %p152 = pneg %p53
      %p153 = pneg %p77
      %p154 = pneg %p74
      %p155 = pneg %p103
      %p156 = pneg %p100
      %s157 = smul.u32 128, %s14
      %p158 = scmp.lt.s32.totalorder %s157, 1023
      %s159 = scalar_select %p158, %s157, 1023
      %s160 = smul.addr %s159, 4
      %s161 = scalar_lea.vmem %s3, %s160
      %s162 = smul.u32 128, %s14
      %p163 = scmp.lt.s32.totalorder %s162, 1023
      %s164 = scalar_select %p163, %s162, 1023
      %s165 = smul.addr %s164, 4
      %s166 = scalar_lea.vmem %s0, %s165
      %s167 = smul.u32 128, %s14
      %s168 = smul.u32 128, %s14
      %p169 = scmp.lt.s32.totalorder %s168, 1023
      %s170 = scalar_select %p169, %s168, 1023
      %s171 = smul.addr %s170, 4
      %s172 = scalar_lea.vmem %s3, %s171
      %s173 = smul.u32 128, %s14
      %v175 = vld [vmem:[%s166] sm:$0xf]
      %v176 = vld [vmem:[%s166 + $0x4] sm:$0xf]
      %v177 = vld [vmem:[%s166 + $0x8] sm:$0xf]
      %v178 = vld [vmem:[%s166 + $0xc] sm:$0xf]
      %v179 = vld [vmem:[%s166 + $0x10] sm:$0xf]
      %v180 = vld [vmem:[%s166 + $0x14] sm:$0xf]
      %v181 = vld [vmem:[%s166 + $0x18] sm:$0xf]
      %v182 = vld [vmem:[%s166 + $0x1c] sm:$0xf]
      %v183 = vld [vmem:[%s166 + $0x20] sm:$0xf]
      %v184 = vld [vmem:[%s166 + $0x24] sm:$0xf]
      %v185 = vld [vmem:[%s166 + $0x28] sm:$0xf]
      %v186 = vld [vmem:[%s166 + $0x2c] sm:$0xf]
      %v187 = vld [vmem:[%s166 + $0x30] sm:$0xf]
      %v188 = vld [vmem:[%s166 + $0x34] sm:$0xf]
      %v189 = vld [vmem:[%s166 + $0x38] sm:$0xf]
      %v190 = vld [vmem:[%s166 + $0x3c] sm:$0xf]
      %v191 = vld [vmem:[%s166 + $0x40] sm:$0xf]
      %v192 = vld [vmem:[%s166 + $0x44] sm:$0xf]
      %v193 = vld [vmem:[%s166 + $0x48] sm:$0xf]
      %v194 = vld [vmem:[%s166 + $0x4c] sm:$0xf]
      %v195 = vld [vmem:[%s166 + $0x50] sm:$0xf]
      %v196 = vld [vmem:[%s166 + $0x54] sm:$0xf]
      %v197 = vld [vmem:[%s166 + $0x58] sm:$0xf]
      %v198 = vld [vmem:[%s166 + $0x5c] sm:$0xf]
      %v199 = vld [vmem:[%s166 + $0x60] sm:$0xf]
      %v200 = vld [vmem:[%s166 + $0x64] sm:$0xf]
      %v201 = vld [vmem:[%s166 + $0x68] sm:$0xf]
      %v202 = vld [vmem:[%s166 + $0x6c] sm:$0xf]
      %v203 = vld [vmem:[%s166 + $0x70] sm:$0xf]
      %v204 = vld [vmem:[%s166 + $0x74] sm:$0xf]
      %v205 = vld [vmem:[%s166 + $0x78] sm:$0xf]
      %v206 = vld [vmem:[%s166 + $0x7c] sm:$0xf]
      %v207 = vld [vmem:[%s166 + $0x80] sm:$0xf]
      %v208 = vld [vmem:[%s166 + $0x84] sm:$0xf]
      %v209 = vld [vmem:[%s166 + $0x88] sm:$0xf]
      %v210 = vld [vmem:[%s166 + $0x8c] sm:$0xf]
      %v211 = vld [vmem:[%s166 + $0x90] sm:$0xf]
      %v212 = vld [vmem:[%s166 + $0x94] sm:$0xf]
      %v213 = vld [vmem:[%s166 + $0x98] sm:$0xf]
      %v214 = vld [vmem:[%s166 + $0x9c] sm:$0xf]
      %v215 = vld [vmem:[%s166 + $0xa0] sm:$0xf]
      %v216 = vld [vmem:[%s166 + $0xa4] sm:$0xf]
      %v217 = vld [vmem:[%s166 + $0xa8] sm:$0xf]
      %v218 = vld [vmem:[%s166 + $0xac] sm:$0xf]
      %v219 = vld [vmem:[%s166 + $0xb0] sm:$0xf]
      %v220 = vld [vmem:[%s166 + $0xb4] sm:$0xf]
      %v221 = vld [vmem:[%s166 + $0xb8] sm:$0xf]
      %v222 = vld [vmem:[%s166 + $0xbc] sm:$0xf]
      %v223 = vld [vmem:[%s166 + $0xc0] sm:$0xf]
      %v224 = vld [vmem:[%s166 + $0xc4] sm:$0xf]
      %v225 = vld [vmem:[%s166 + $0xc8] sm:$0xf]
      %v226 = vld [vmem:[%s166 + $0xcc] sm:$0xf]
      %v227 = vld [vmem:[%s166 + $0xd0] sm:$0xf]
      %v228 = vld [vmem:[%s166 + $0xd4] sm:$0xf]
      %v229 = vld [vmem:[%s166 + $0xd8] sm:$0xf]
      %v230 = vld [vmem:[%s166 + $0xdc] sm:$0xf]
      %v231 = vld [vmem:[%s166 + $0xe0] sm:$0xf]
      %v232 = vld [vmem:[%s166 + $0xe4] sm:$0xf]
      %v233 = vld [vmem:[%s166 + $0xe8] sm:$0xf]
      %v234 = vld [vmem:[%s166 + $0xec] sm:$0xf]
      %v235 = vld [vmem:[%s166 + $0xf0] sm:$0xf]
      %v236 = vld [vmem:[%s166 + $0xf4] sm:$0xf]
      %v237 = vld [vmem:[%s166 + $0xf8] sm:$0xf]
      %v238 = vld [vmem:[%s166 + $0xfc] sm:$0xf]
      %v239 = vld [vmem:[%s166 + $0x100] sm:$0xf]
      %v240 = vld [vmem:[%s166 + $0x104] sm:$0xf]
      %v241 = vld [vmem:[%s166 + $0x108] sm:$0xf]
      %v242 = vld [vmem:[%s166 + $0x10c] sm:$0xf]
      %v243 = vld [vmem:[%s166 + $0x110] sm:$0xf]
      %v244 = vld [vmem:[%s166 + $0x114] sm:$0xf]
      %v245 = vld [vmem:[%s166 + $0x118] sm:$0xf]
      %v246 = vld [vmem:[%s166 + $0x11c] sm:$0xf]
      %v247 = vld [vmem:[%s166 + $0x120] sm:$0xf]
      %v248 = vld [vmem:[%s166 + $0x124] sm:$0xf]
      %v249 = vld [vmem:[%s166 + $0x128] sm:$0xf]
      %v250 = vld [vmem:[%s166 + $0x12c] sm:$0xf]
      %v251 = vld [vmem:[%s166 + $0x130] sm:$0xf]
      %v252 = vld [vmem:[%s166 + $0x134] sm:$0xf]
      %v253 = vld [vmem:[%s166 + $0x138] sm:$0xf]
      %v254 = vld [vmem:[%s166 + $0x13c] sm:$0xf]
      %v255 = vld [vmem:[%s166 + $0x140] sm:$0xf]
      %v256 = vld [vmem:[%s166 + $0x144] sm:$0xf]
      %v257 = vld [vmem:[%s166 + $0x148] sm:$0xf]
      %v258 = vld [vmem:[%s166 + $0x14c] sm:$0xf]
      %v259 = vld [vmem:[%s166 + $0x150] sm:$0xf]
      %v260 = vld [vmem:[%s166 + $0x154] sm:$0xf]
      %v261 = vld [vmem:[%s166 + $0x158] sm:$0xf]
      %v262 = vld [vmem:[%s166 + $0x15c] sm:$0xf]
      %v263 = vld [vmem:[%s166 + $0x160] sm:$0xf]
      %v264 = vld [vmem:[%s166 + $0x164] sm:$0xf]
      %v265 = vld [vmem:[%s166 + $0x168] sm:$0xf]
      %v266 = vld [vmem:[%s166 + $0x16c] sm:$0xf]
      %v267 = vld [vmem:[%s166 + $0x170] sm:$0xf]
      %v268 = vld [vmem:[%s166 + $0x174] sm:$0xf]
      %v269 = vld [vmem:[%s166 + $0x178] sm:$0xf]
      %v270 = vld [vmem:[%s166 + $0x17c] sm:$0xf]
      %v271 = vld [vmem:[%s166 + $0x180] sm:$0xf]
      %v272 = vld [vmem:[%s166 + $0x184] sm:$0xf]
      %v273 = vld [vmem:[%s166 + $0x188] sm:$0xf]
      %v274 = vld [vmem:[%s166 + $0x18c] sm:$0xf]
      %v275 = vld [vmem:[%s166 + $0x190] sm:$0xf]
      %v276 = vld [vmem:[%s166 + $0x194] sm:$0xf]
      %v277 = vld [vmem:[%s166 + $0x198] sm:$0xf]
      %v278 = vld [vmem:[%s166 + $0x19c] sm:$0xf]
      %v279 = vld [vmem:[%s166 + $0x1a0] sm:$0xf]
      %v280 = vld [vmem:[%s166 + $0x1a4] sm:$0xf]
      %v281 = vld [vmem:[%s166 + $0x1a8] sm:$0xf]
      %v282 = vld [vmem:[%s166 + $0x1ac] sm:$0xf]
      %v283 = vld [vmem:[%s166 + $0x1b0] sm:$0xf]
      %v284 = vld [vmem:[%s166 + $0x1b4] sm:$0xf]
      %v285 = vld [vmem:[%s166 + $0x1b8] sm:$0xf]
      %v286 = vld [vmem:[%s166 + $0x1bc] sm:$0xf]
      %v287 = vld [vmem:[%s166 + $0x1c0] sm:$0xf]
      %v288 = vld [vmem:[%s166 + $0x1c4] sm:$0xf]
      %v289 = vld [vmem:[%s166 + $0x1c8] sm:$0xf]
      %v290 = vld [vmem:[%s166 + $0x1cc] sm:$0xf]
      %v291 = vld [vmem:[%s166 + $0x1d0] sm:$0xf]
      %v292 = vld [vmem:[%s166 + $0x1d4] sm:$0xf]
      %v293 = vld [vmem:[%s166 + $0x1d8] sm:$0xf]
      %v294 = vld [vmem:[%s166 + $0x1dc] sm:$0xf]
      %v295 = vld [vmem:[%s166 + $0x1e0] sm:$0xf]
      %v296 = vld [vmem:[%s166 + $0x1e4] sm:$0xf]
      %v297 = vld [vmem:[%s166 + $0x1e8] sm:$0xf]
      %v298 = vld [vmem:[%s166 + $0x1ec] sm:$0xf]
      %v299 = vld [vmem:[%s166 + $0x1f0] sm:$0xf]
      %v300 = vld [vmem:[%s166 + $0x1f4] sm:$0xf]
      %v301 = vld [vmem:[%s166 + $0x1f8] sm:$0xf]
      %v302 = vld [vmem:[%s166 + $0x1fc] sm:$0xf]
      %v303 = vld [vmem:[%s1] sm:$0xf]
      %v304 = vld [vmem:[%s1 + $0x4] sm:$0xf]
      %v305 = vld [vmem:[%s2] sm:$0x1]
      %v307 = vlaneseq
      %v308 = vshrl.u32 %v307, 7
      %v309 = vsub.s32 0, %v308
      %v310 = vrot.slane %v305, %v309
      %v440 = vunpack.c.l.b16 %v175
      %v441 = vunpack.c.l.b16 %v176
      %v442 = vunpack.c.l.b16 %v177
      %v443 = vunpack.c.l.b16 %v178
      %v444 = vunpack.c.l.b16 %v179
      %v445 = vunpack.c.l.b16 %v180
      %v446 = vunpack.c.l.b16 %v181
      %v447 = vunpack.c.l.b16 %v182
      %v448 = vunpack.c.l.b16 %v183
      %v449 = vunpack.c.l.b16 %v184
      %v450 = vunpack.c.l.b16 %v185
      %v451 = vunpack.c.l.b16 %v186
      %v452 = vunpack.c.l.b16 %v187
      %v453 = vunpack.c.l.b16 %v188
      %v454 = vunpack.c.l.b16 %v189
      %v455 = vunpack.c.l.b16 %v190
      %v456 = vunpack.c.l.b16 %v191
      %v457 = vunpack.c.l.b16 %v192
      %v458 = vunpack.c.l.b16 %v193
      %v459 = vunpack.c.l.b16 %v194
      %v460 = vunpack.c.l.b16 %v195
      %v461 = vunpack.c.l.b16 %v196
      %v462 = vunpack.c.l.b16 %v197
      %v463 = vunpack.c.l.b16 %v198
      %v464 = vunpack.c.l.b16 %v199
      %v465 = vunpack.c.l.b16 %v200
      %v466 = vunpack.c.l.b16 %v201
      %v467 = vunpack.c.l.b16 %v202
      %v468 = vunpack.c.l.b16 %v203
      %v469 = vunpack.c.l.b16 %v204
      %v470 = vunpack.c.l.b16 %v205
      %v471 = vunpack.c.l.b16 %v206
      %v472 = vunpack.c.l.b16 %v207
      %v473 = vunpack.c.l.b16 %v208
      %v474 = vunpack.c.l.b16 %v209
      %v475 = vunpack.c.l.b16 %v210
      %v476 = vunpack.c.l.b16 %v211
      %v477 = vunpack.c.l.b16 %v212
      %v478 = vunpack.c.l.b16 %v213
      %v479 = vunpack.c.l.b16 %v214
      %v480 = vunpack.c.l.b16 %v215
      %v481 = vunpack.c.l.b16 %v216
      %v482 = vunpack.c.l.b16 %v217
      %v483 = vunpack.c.l.b16 %v218
      %v484 = vunpack.c.l.b16 %v219
      %v485 = vunpack.c.l.b16 %v220
      %v486 = vunpack.c.l.b16 %v221
      %v487 = vunpack.c.l.b16 %v222
      %v488 = vunpack.c.l.b16 %v223
      %v489 = vunpack.c.l.b16 %v224
      %v490 = vunpack.c.l.b16 %v225
      %v491 = vunpack.c.l.b16 %v226
      %v492 = vunpack.c.l.b16 %v227
      %v493 = vunpack.c.l.b16 %v228
      %v494 = vunpack.c.l.b16 %v229
      %v495 = vunpack.c.l.b16 %v230
      %v496 = vunpack.c.l.b16 %v231
      %v497 = vunpack.c.l.b16 %v232
      %v498 = vunpack.c.l.b16 %v233
      %v499 = vunpack.c.l.b16 %v234
      %v500 = vunpack.c.l.b16 %v235
      %v501 = vunpack.c.l.b16 %v236
      %v502 = vunpack.c.l.b16 %v237
      %v503 = vunpack.c.l.b16 %v238
      %v504 = vunpack.c.l.b16 %v239
      %v505 = vunpack.c.l.b16 %v240
      %v506 = vunpack.c.l.b16 %v241
      %v507 = vunpack.c.l.b16 %v242
      %v508 = vunpack.c.l.b16 %v243
      %v509 = vunpack.c.l.b16 %v244
      %v510 = vunpack.c.l.b16 %v245
      %v511 = vunpack.c.l.b16 %v246
      %v512 = vunpack.c.l.b16 %v247
      %v513 = vunpack.c.l.b16 %v248
      %v514 = vunpack.c.l.b16 %v249
      %v515 = vunpack.c.l.b16 %v250
      %v516 = vunpack.c.l.b16 %v251
      %v517 = vunpack.c.l.b16 %v252
      %v518 = vunpack.c.l.b16 %v253
      %v519 = vunpack.c.l.b16 %v254
      %v520 = vunpack.c.l.b16 %v255
      %v521 = vunpack.c.l.b16 %v256
      %v522 = vunpack.c.l.b16 %v257
      %v523 = vunpack.c.l.b16 %v258
      %v524 = vunpack.c.l.b16 %v259
      %v525 = vunpack.c.l.b16 %v260
      %v526 = vunpack.c.l.b16 %v261
      %v527 = vunpack.c.l.b16 %v262
      %v528 = vunpack.c.l.b16 %v263
      %v529 = vunpack.c.l.b16 %v264
      %v530 = vunpack.c.l.b16 %v265
      %v531 = vunpack.c.l.b16 %v266
      %v532 = vunpack.c.l.b16 %v267
      %v533 = vunpack.c.l.b16 %v268
      %v534 = vunpack.c.l.b16 %v269
      %v535 = vunpack.c.l.b16 %v270
      %v536 = vunpack.c.l.b16 %v271
      %v537 = vunpack.c.l.b16 %v272
      %v538 = vunpack.c.l.b16 %v273
      %v539 = vunpack.c.l.b16 %v274
      %v540 = vunpack.c.l.b16 %v275
      %v541 = vunpack.c.l.b16 %v276
      %v542 = vunpack.c.l.b16 %v277
      %v543 = vunpack.c.l.b16 %v278
      %v544 = vunpack.c.l.b16 %v279
      %v545 = vunpack.c.l.b16 %v280
      %v546 = vunpack.c.l.b16 %v281
      %v547 = vunpack.c.l.b16 %v282
      %v548 = vunpack.c.l.b16 %v283
      %v549 = vunpack.c.l.b16 %v284
      %v550 = vunpack.c.l.b16 %v285
      %v551 = vunpack.c.l.b16 %v286
      %v552 = vunpack.c.l.b16 %v287
      %v553 = vunpack.c.l.b16 %v288
      %v554 = vunpack.c.l.b16 %v289
      %v555 = vunpack.c.l.b16 %v290
      %v556 = vunpack.c.l.b16 %v291
      %v557 = vunpack.c.l.b16 %v292
      %v558 = vunpack.c.l.b16 %v293
      %v559 = vunpack.c.l.b16 %v294
      %v560 = vunpack.c.l.b16 %v295
      %v561 = vunpack.c.l.b16 %v296
      %v562 = vunpack.c.l.b16 %v297
      %v563 = vunpack.c.l.b16 %v298
      %v564 = vunpack.c.l.b16 %v299
      %v565 = vunpack.c.l.b16 %v300
      %v566 = vunpack.c.l.b16 %v301
      %v567 = vunpack.c.l.b16 %v302
      %v568 = vpack.c.b16 %v441, %v440
      %v569 = vpack.c.b16 %v443, %v442
      %v570 = vpack.c.b16 %v445, %v444
      %v571 = vpack.c.b16 %v447, %v446
      %v572 = vpack.c.b16 %v449, %v448
      %v573 = vpack.c.b16 %v451, %v450
      %v574 = vpack.c.b16 %v453, %v452
      %v575 = vpack.c.b16 %v455, %v454
      %v576 = vpack.c.b16 %v457, %v456
      %v577 = vpack.c.b16 %v459, %v458
      %v578 = vpack.c.b16 %v461, %v460
      %v579 = vpack.c.b16 %v463, %v462
      %v580 = vpack.c.b16 %v465, %v464
      %v581 = vpack.c.b16 %v467, %v466
      %v582 = vpack.c.b16 %v469, %v468
      %v583 = vpack.c.b16 %v471, %v470
      %v584 = vpack.c.b16 %v473, %v472
      %v585 = vpack.c.b16 %v475, %v474
      %v586 = vpack.c.b16 %v477, %v476
      %v587 = vpack.c.b16 %v479, %v478
      %v588 = vpack.c.b16 %v481, %v480
      %v589 = vpack.c.b16 %v483, %v482
      %v590 = vpack.c.b16 %v485, %v484
      %v591 = vpack.c.b16 %v487, %v486
      %v592 = vpack.c.b16 %v489, %v488
      %v593 = vpack.c.b16 %v491, %v490
      %v594 = vpack.c.b16 %v493, %v492
      %v595 = vpack.c.b16 %v495, %v494
      %v596 = vpack.c.b16 %v497, %v496
      %v597 = vpack.c.b16 %v499, %v498
      %v598 = vpack.c.b16 %v501, %v500
      %v599 = vpack.c.b16 %v503, %v502
      %v600 = vpack.c.b16 %v505, %v504
      %v601 = vpack.c.b16 %v507, %v506
      %v602 = vpack.c.b16 %v509, %v508
      %v603 = vpack.c.b16 %v511, %v510
      %v604 = vpack.c.b16 %v513, %v512
      %v605 = vpack.c.b16 %v515, %v514
      %v606 = vpack.c.b16 %v517, %v516
      %v607 = vpack.c.b16 %v519, %v518
      %v608 = vpack.c.b16 %v521, %v520
      %v609 = vpack.c.b16 %v523, %v522
      %v610 = vpack.c.b16 %v525, %v524
      %v611 = vpack.c.b16 %v527, %v526
      %v612 = vpack.c.b16 %v529, %v528
      %v613 = vpack.c.b16 %v531, %v530
      %v614 = vpack.c.b16 %v533, %v532
      %v615 = vpack.c.b16 %v535, %v534
      %v616 = vpack.c.b16 %v537, %v536
      %v617 = vpack.c.b16 %v539, %v538
      %v618 = vpack.c.b16 %v541, %v540
      %v619 = vpack.c.b16 %v543, %v542
      %v620 = vpack.c.b16 %v545, %v544
      %v621 = vpack.c.b16 %v547, %v546
      %v622 = vpack.c.b16 %v549, %v548
      %v623 = vpack.c.b16 %v551, %v550
      %v624 = vpack.c.b16 %v553, %v552
      %v625 = vpack.c.b16 %v555, %v554
      %v626 = vpack.c.b16 %v557, %v556
      %v627 = vpack.c.b16 %v559, %v558
      %v628 = vpack.c.b16 %v561, %v560
      %v629 = vpack.c.b16 %v563, %v562
      %v630 = vpack.c.b16 %v565, %v564
      %v631 = vpack.c.b16 %v567, %v566
      %v634 = vunpack.c.l.b16 %v303
      %v635 = vunpack.c.l.b16 %v304
      %v636 = vpack.c.b16 %v635, %v634
      %vm638 = vcmask 130048
      %v640 = vsel %vm638, %v568, 0
      %v643 = vsel %vm638, %v569, 0
      %v646 = vsel %vm638, %v570, 0
      %v649 = vsel %vm638, %v571, 0
      %v652 = vsel %vm638, %v572, 0
      %v655 = vsel %vm638, %v573, 0
      %v658 = vsel %vm638, %v574, 0
      %v661 = vsel %vm638, %v575, 0
      %v664 = vsel %vm638, %v576, 0
      %v667 = vsel %vm638, %v577, 0
      %v670 = vsel %vm638, %v578, 0
      %v673 = vsel %vm638, %v579, 0
      %v676 = vsel %vm638, %v580, 0
      %v679 = vsel %vm638, %v581, 0
      %v682 = vsel %vm638, %v582, 0
      %v685 = vsel %vm638, %v583, 0
      %v688 = vsel %vm638, %v584, 0
      %v691 = vsel %vm638, %v585, 0
      %v694 = vsel %vm638, %v586, 0
      %v697 = vsel %vm638, %v587, 0
      %v700 = vsel %vm638, %v588, 0
      %v703 = vsel %vm638, %v589, 0
      %v706 = vsel %vm638, %v590, 0
      %v709 = vsel %vm638, %v591, 0
      %v712 = vsel %vm638, %v592, 0
      %v715 = vsel %vm638, %v593, 0
      %v718 = vsel %vm638, %v594, 0
      %v721 = vsel %vm638, %v595, 0
      %v724 = vsel %vm638, %v596, 0
      %v727 = vsel %vm638, %v597, 0
      %v730 = vsel %vm638, %v598, 0
      %v733 = vsel %vm638, %v599, 0
      %v736 = vsel %vm638, %v600, 0
      %v739 = vsel %vm638, %v601, 0
      %v742 = vsel %vm638, %v602, 0
      %v745 = vsel %vm638, %v603, 0
      %v748 = vsel %vm638, %v604, 0
      %v751 = vsel %vm638, %v605, 0
      %v754 = vsel %vm638, %v606, 0
      %v757 = vsel %vm638, %v607, 0
      %v760 = vsel %vm638, %v608, 0
      %v763 = vsel %vm638, %v609, 0
      %v766 = vsel %vm638, %v610, 0
      %v769 = vsel %vm638, %v611, 0
      %v772 = vsel %vm638, %v612, 0
      %v775 = vsel %vm638, %v613, 0
      %v778 = vsel %vm638, %v614, 0
      %v781 = vsel %vm638, %v615, 0
      %v784 = vsel %vm638, %v616, 0
      %v787 = vsel %vm638, %v617, 0
      %v790 = vsel %vm638, %v618, 0
      %v793 = vsel %vm638, %v619, 0
      %v796 = vsel %vm638, %v620, 0
      %v799 = vsel %vm638, %v621, 0
      %v802 = vsel %vm638, %v622, 0
      %v805 = vsel %vm638, %v623, 0
      %v808 = vsel %vm638, %v624, 0
      %v811 = vsel %vm638, %v625, 0
      %v814 = vsel %vm638, %v626, 0
      %v817 = vsel %vm638, %v627, 0
      %v820 = vsel %vm638, %v628, 0
      %v823 = vsel %vm638, %v629, 0
      %v826 = vsel %vm638, %v630, 0
      %v829 = vsel %vm638, %v631, 0
      %831 = vmatprep.subr.bf16.mxu0 0
      %832 = vmatpush1.bf16.msra.mxu0 %v636
      %833 = vmatprep.subr.bf16.mxu0 0
      %834 = vmatpush1.bf16.msra.mxu0 0
      %835 = vmatprep.subr.bf16.mxu0 0
      %836 = vmatpush1.bf16.msra.mxu0 0
      %837 = vmatprep.subr.bf16.mxu0 0
      %838 = vmatpush1.bf16.msra.mxu0 0
      %839 = vmatprep.subr.bf16.mxu0 0
      %840 = vmatpush1.bf16.msra.mxu0 0
      %841 = vmatprep.subr.bf16.mxu0 0
      %842 = vmatpush1.bf16.msra.mxu0 0
      %843 = vmatprep.subr.bf16.mxu0 0
      %844 = vmatpush1.bf16.msra.mxu0 0
      %845 = vmatprep.subr.bf16.mxu0 0
      %846 = vmatpush1.bf16.msra.mxu0 0
      %847 = vmatprep.subr.bf16.mxu0 0
      %848 = vmatpush1.bf16.msra.mxu0 0
      %849 = vmatprep.subr.bf16.mxu0 0
      %850 = vmatpush1.bf16.msra.mxu0 0
      %851 = vmatprep.subr.bf16.mxu0 0
      %852 = vmatpush1.bf16.msra.mxu0 0
      %853 = vmatprep.subr.bf16.mxu0 0
      %854 = vmatpush1.bf16.msra.mxu0 0
      %855 = vmatprep.subr.bf16.mxu0 0
      %856 = vmatpush1.bf16.msra.mxu0 0
      %857 = vmatprep.subr.bf16.mxu0 0
      %858 = vmatpush1.bf16.msra.mxu0 0
      %859 = vmatprep.subr.bf16.mxu0 0
      %860 = vmatpush1.bf16.msra.mxu0 0
      %861 = vmatprep.subr.bf16.mxu0 0
      %862 = vmatpush1.bf16.msra.mxu0 0
      %863 = vmatprep.mubr.bf16.mxu0 0
      %864 = vmatmul.mubr.bf16.gmra.mrb[0].mxu0 %v640
      %v865 = vpop.f32.mrb[0].mxu0
      %v866 = vadd.f32 %v310, %v865
      %v867 = vpop.f32.mrb[0].mxu0
      %v868 = vpop.f32.mrb[0].mxu0
      %v869 = vadd.f32 %v310, %v868
      %v870 = vpop.f32.mrb[0].mxu0
      %871 = vmatprep.mubr.bf16.mxu0 0
      %872 = vmatmul.mubr.bf16.gmra.mrb[0].mxu0 %v643
      %v873 = vpop.f32.mrb[0].mxu0
      %v874 = vadd.f32 %v310, %v873
      %v875 = vpop.f32.mrb[0].mxu0
      %v876 = vpop.f32.mrb[0].mxu0
      %v877 = vadd.f32 %v310, %v876
      %v878 = vpop.f32.mrb[0].mxu0
      %879 = vmatprep.mubr.bf16.mxu0 0
      %880 = vmatmul.mubr.bf16.gmra.mrb[0].mxu0 %v646
      %v881 = vpop.f32.mrb[0].mxu0
      %v882 = vadd.f32 %v310, %v881
      %v883 = vpop.f32.mrb[0].mxu0
      %v884 = vpop.f32.mrb[0].mxu0
      %v885 = vadd.f32 %v310, %v884
      %v886 = vpop.f32.mrb[0].mxu0
      %887 = vmatprep.mubr.bf16.mxu0 0
      %888 = vmatmul.mubr.bf16.gmra.mrb[0].mxu0 %v649
      %v889 = vpop.f32.mrb[0].mxu0
      %v890 = vadd.f32 %v310, %v889
      %v891 = vpop.f32.mrb[0].mxu0
      %v892 = vpop.f32.mrb[0].mxu0
      %v893 = vadd.f32 %v310, %v892
      %v894 = vpop.f32.mrb[0].mxu0
      %895 = vmatprep.mubr.bf16.mxu0 0
      %896 = vmatmul.mubr.bf16.gmra.mrb[0].mxu0 %v652
      %v897 = vpop.f32.mrb[0].mxu0
      %v898 = vadd.f32 %v310, %v897
      %v899 = vpop.f32.mrb[0].mxu0
      %v900 = vpop.f32.mrb[0].mxu0
      %v901 = vadd.f32 %v310, %v900
      %v902 = vpop.f32.mrb[0].mxu0
      %903 = vmatprep.mubr.bf16.mxu0 0
      %904 = vmatmul.mubr.bf16.gmra.mrb[0].mxu0 %v655
      %v905 = vpop.f32.mrb[0].mxu0
      %v906 = vadd.f32 %v310, %v905
      %v907 = vpop.f32.mrb[0].mxu0
      %v908 = vpop.f32.mrb[0].mxu0
      %v909 = vadd.f32 %v310, %v908
      %v910 = vpop.f32.mrb[0].mxu0
      %911 = vmatprep.mubr.bf16.mxu0 0
      %912 = vmatmul.mubr.bf16.gmra.mrb[0].mxu0 %v658
      %v913 = vpop.f32.mrb[0].mxu0
      %v914 = vadd.f32 %v310, %v913
      %v915 = vpop.f32.mrb[0].mxu0
      %v916 = vpop.f32.mrb[0].mxu0
      %v917 = vadd.f32 %v310, %v916
      %v918 = vpop.f32.mrb[0].mxu0
      %919 = vmatprep.mubr.bf16.mxu0 0
      %920 = vmatmul.mubr.bf16.gmra.mrb[0].mxu0 %v661
      %v921 = vpop.f32.mrb[0].mxu0
      %v922 = vadd.f32 %v310, %v921
      %v923 = vpop.f32.mrb[0].mxu0
      %v924 = vpop.f32.mrb[0].mxu0
      %v925 = vadd.f32 %v310, %v924
      %v926 = vpop.f32.mrb[0].mxu0
      %927 = vmatprep.mubr.bf16.mxu0 0
      %928 = vmatmul.mubr.bf16.gmra.mrb[0].mxu0 %v664
      %v929 = vpop.f32.mrb[0].mxu0
      %v930 = vadd.f32 %v310, %v929
      %v931 = vpop.f32.mrb[0].mxu0
      %v932 = vpop.f32.mrb[0].mxu0
      %v933 = vadd.f32 %v310, %v932
      %v934 = vpop.f32.mrb[0].mxu0
      %935 = vmatprep.mubr.bf16.mxu0 0
      %936 = vmatmul.mubr.bf16.gmra.mrb[0].mxu0 %v667
      %v937 = vpop.f32.mrb[0].mxu0
      %v938 = vadd.f32 %v310, %v937
      %v939 = vpop.f32.mrb[0].mxu0
      %v940 = vpop.f32.mrb[0].mxu0
      %v941 = vadd.f32 %v310, %v940
      %v942 = vpop.f32.mrb[0].mxu0
      %943 = vmatprep.mubr.bf16.mxu0 0
      %944 = vmatmul.mubr.bf16.gmra.mrb[0].mxu0 %v670
      %v945 = vpop.f32.mrb[0].mxu0
      %v946 = vadd.f32 %v310, %v945
      %v947 = vpop.f32.mrb[0].mxu0
      %v948 = vpop.f32.mrb[0].mxu0
      %v949 = vadd.f32 %v310, %v948
      %v950 = vpop.f32.mrb[0].mxu0
      %951 = vmatprep.mubr.bf16.mxu0 0
      %952 = vmatmul.mubr.bf16.gmra.mrb[0].mxu0 %v673
      %v953 = vpop.f32.mrb[0].mxu0
      %v954 = vadd.f32 %v310, %v953
      %v955 = vpop.f32.mrb[0].mxu0
      %v956 = vpop.f32.mrb[0].mxu0
      %v957 = vadd.f32 %v310, %v956
      %v958 = vpop.f32.mrb[0].mxu0
      %959 = vmatprep.mubr.bf16.mxu0 0
      %960 = vmatmul.mubr.bf16.gmra.mrb[0].mxu0 %v676
      %v961 = vpop.f32.mrb[0].mxu0
      %v962 = vadd.f32 %v310, %v961
      %v963 = vpop.f32.mrb[0].mxu0
      %v964 = vpop.f32.mrb[0].mxu0
      %v965 = vadd.f32 %v310, %v964
      %v966 = vpop.f32.mrb[0].mxu0
      %967 = vmatprep.mubr.bf16.mxu0 0
      %968 = vmatmul.mubr.bf16.gmra.mrb[0].mxu0 %v679
      %v969 = vpop.f32.mrb[0].mxu0
      %v970 = vadd.f32 %v310, %v969
      %v971 = vpop.f32.mrb[0].mxu0
      %v972 = vpop.f32.mrb[0].mxu0
      %v973 = vadd.f32 %v310, %v972
      %v974 = vpop.f32.mrb[0].mxu0
      %975 = vmatprep.mubr.bf16.mxu0 0
      %976 = vmatmul.mubr.bf16.gmra.mrb[0].mxu0 %v682
      %v977 = vpop.f32.mrb[0].mxu0
      %v978 = vadd.f32 %v310, %v977
      %v979 = vpop.f32.mrb[0].mxu0
      %v980 = vpop.f32.mrb[0].mxu0
      %v981 = vadd.f32 %v310, %v980
      %v982 = vpop.f32.mrb[0].mxu0
      %983 = vmatprep.mubr.bf16.mxu0 0
      %984 = vmatmul.mubr.bf16.gmra.mrb[0].mxu0 %v685
      %v985 = vpop.f32.mrb[0].mxu0
      %v986 = vadd.f32 %v310, %v985
      %v987 = vpop.f32.mrb[0].mxu0
      %v988 = vpop.f32.mrb[0].mxu0
      %v989 = vadd.f32 %v310, %v988
      %v990 = vpop.f32.mrb[0].mxu0
      %991 = vmatprep.mubr.bf16.mxu0 0
      %992 = vmatmul.mubr.bf16.gmra.mrb[0].mxu0 %v688
      %v993 = vpop.f32.mrb[0].mxu0
      %v994 = vadd.f32 %v310, %v993
      %v995 = vpop.f32.mrb[0].mxu0
      %v996 = vpop.f32.mrb[0].mxu0
      %v997 = vadd.f32 %v310, %v996
      %v998 = vpop.f32.mrb[0].mxu0
      %999 = vmatprep.mubr.bf16.mxu0 0
      %1000 = vmatmul.mubr.bf16.gmra.mrb[0].mxu0 %v691
      %v1001 = vpop.f32.mrb[0].mxu0
      %v1002 = vadd.f32 %v310, %v1001
      %v1003 = vpop.f32.mrb[0].mxu0
      %v1004 = vpop.f32.mrb[0].mxu0
      %v1005 = vadd.f32 %v310, %v1004
      %v1006 = vpop.f32.mrb[0].mxu0
      %1007 = vmatprep.mubr.bf16.mxu0 0
      %1008 = vmatmul.mubr.bf16.gmra.mrb[0].mxu0 %v694
      %v1009 = vpop.f32.mrb[0].mxu0
      %v1010 = vadd.f32 %v310, %v1009
      %v1011 = vpop.f32.mrb[0].mxu0
      %v1012 = vpop.f32.mrb[0].mxu0
      %v1013 = vadd.f32 %v310, %v1012
      %v1014 = vpop.f32.mrb[0].mxu0
      %1015 = vmatprep.mubr.bf16.mxu0 0
      %1016 = vmatmul.mubr.bf16.gmra.mrb[0].mxu0 %v697
      %v1017 = vpop.f32.mrb[0].mxu0
      %v1018 = vadd.f32 %v310, %v1017
      %v1019 = vpop.f32.mrb[0].mxu0
      %v1020 = vpop.f32.mrb[0].mxu0
      %v1021 = vadd.f32 %v310, %v1020
      %v1022 = vpop.f32.mrb[0].mxu0
      %1023 = vmatprep.mubr.bf16.mxu0 0
      %1024 = vmatmul.mubr.bf16.gmra.mrb[0].mxu0 %v700
      %v1025 = vpop.f32.mrb[0].mxu0
      %v1026 = vadd.f32 %v310, %v1025
      %v1027 = vpop.f32.mrb[0].mxu0
      %v1028 = vpop.f32.mrb[0].mxu0
      %v1029 = vadd.f32 %v310, %v1028
      %v1030 = vpop.f32.mrb[0].mxu0
      %1031 = vmatprep.mubr.bf16.mxu0 0
      %1032 = vmatmul.mubr.bf16.gmra.mrb[0].mxu0 %v703
      %v1033 = vpop.f32.mrb[0].mxu0
      %v1034 = vadd.f32 %v310, %v1033
      %v1035 = vpop.f32.mrb[0].mxu0
      %v1036 = vpop.f32.mrb[0].mxu0
      %v1037 = vadd.f32 %v310, %v1036
      %v1038 = vpop.f32.mrb[0].mxu0
      %1039 = vmatprep.mubr.bf16.mxu0 0
      %1040 = vmatmul.mubr.bf16.gmra.mrb[0].mxu0 %v706
      %v1041 = vpop.f32.mrb[0].mxu0
      %v1042 = vadd.f32 %v310, %v1041
      %v1043 = vpop.f32.mrb[0].mxu0
      %v1044 = vpop.f32.mrb[0].mxu0
      %v1045 = vadd.f32 %v310, %v1044
      %v1046 = vpop.f32.mrb[0].mxu0
      %1047 = vmatprep.mubr.bf16.mxu0 0
      %1048 = vmatmul.mubr.bf16.gmra.mrb[0].mxu0 %v709
      %v1049 = vpop.f32.mrb[0].mxu0
      %v1050 = vadd.f32 %v310, %v1049
      %v1051 = vpop.f32.mrb[0].mxu0
      %v1052 = vpop.f32.mrb[0].mxu0
      %v1053 = vadd.f32 %v310, %v1052
      %v1054 = vpop.f32.mrb[0].mxu0
      %1055 = vmatprep.mubr.bf16.mxu0 0
      %1056 = vmatmul.mubr.bf16.gmra.mrb[0].mxu0 %v712
      %v1057 = vpop.f32.mrb[0].mxu0
      %v1058 = vadd.f32 %v310, %v1057
      %v1059 = vpop.f32.mrb[0].mxu0
      %v1060 = vpop.f32.mrb[0].mxu0
      %v1061 = vadd.f32 %v310, %v1060
      %v1062 = vpop.f32.mrb[0].mxu0
      %1063 = vmatprep.mubr.bf16.mxu0 0
      %1064 = vmatmul.mubr.bf16.gmra.mrb[0].mxu0 %v715
      %v1065 = vpop.f32.mrb[0].mxu0
      %v1066 = vadd.f32 %v310, %v1065
      %v1067 = vpop.f32.mrb[0].mxu0
      %v1068 = vpop.f32.mrb[0].mxu0
      %v1069 = vadd.f32 %v310, %v1068
      %v1070 = vpop.f32.mrb[0].mxu0
      %1071 = vmatprep.mubr.bf16.mxu0 0
      %1072 = vmatmul.mubr.bf16.gmra.mrb[0].mxu0 %v718
      %v1073 = vpop.f32.mrb[0].mxu0
      %v1074 = vadd.f32 %v310, %v1073
      %v1075 = vpop.f32.mrb[0].mxu0
      %v1076 = vpop.f32.mrb[0].mxu0
      %v1077 = vadd.f32 %v310, %v1076
      %v1078 = vpop.f32.mrb[0].mxu0
      %1079 = vmatprep.mubr.bf16.mxu0 0
      %1080 = vmatmul.mubr.bf16.gmra.mrb[0].mxu0 %v721
      %v1081 = vpop.f32.mrb[0].mxu0
      %v1082 = vadd.f32 %v310, %v1081
      %v1083 = vpop.f32.mrb[0].mxu0
      %v1084 = vpop.f32.mrb[0].mxu0
      %v1085 = vadd.f32 %v310, %v1084
      %v1086 = vpop.f32.mrb[0].mxu0
      %1087 = vmatprep.mubr.bf16.mxu0 0
      %1088 = vmatmul.mubr.bf16.gmra.mrb[0].mxu0 %v724
      %v1089 = vpop.f32.mrb[0].mxu0
      %v1090 = vadd.f32 %v310, %v1089
      %v1091 = vpop.f32.mrb[0].mxu0
      %v1092 = vpop.f32.mrb[0].mxu0
      %v1093 = vadd.f32 %v310, %v1092
      %v1094 = vpop.f32.mrb[0].mxu0
      %1095 = vmatprep.mubr.bf16.mxu0 0
      %1096 = vmatmul.mubr.bf16.gmra.mrb[0].mxu0 %v727
      %v1097 = vpop.f32.mrb[0].mxu0
      %v1098 = vadd.f32 %v310, %v1097
      %v1099 = vpop.f32.mrb[0].mxu0
      %v1100 = vpop.f32.mrb[0].mxu0
      %v1101 = vadd.f32 %v310, %v1100
      %v1102 = vpop.f32.mrb[0].mxu0
      %1103 = vmatprep.mubr.bf16.mxu0 0
      %1104 = vmatmul.mubr.bf16.gmra.mrb[0].mxu0 %v730
      %v1105 = vpop.f32.mrb[0].mxu0
      %v1106 = vadd.f32 %v310, %v1105
      %v1107 = vpop.f32.mrb[0].mxu0
      %v1108 = vpop.f32.mrb[0].mxu0
      %v1109 = vadd.f32 %v310, %v1108
      %v1110 = vpop.f32.mrb[0].mxu0
      %1111 = vmatprep.mubr.bf16.mxu0 0
      %1112 = vmatmul.mubr.bf16.gmra.mrb[0].mxu0 %v733
      %v1113 = vpop.f32.mrb[0].mxu0
      %v1114 = vadd.f32 %v310, %v1113
      %v1115 = vpop.f32.mrb[0].mxu0
      %v1116 = vpop.f32.mrb[0].mxu0
      %v1117 = vadd.f32 %v310, %v1116
      %v1118 = vpop.f32.mrb[0].mxu0
      %1119 = vmatprep.mubr.bf16.mxu0 0
      %1120 = vmatmul.mubr.bf16.gmra.mrb[0].mxu0 %v736
      %v1121 = vpop.f32.mrb[0].mxu0
      %v1122 = vadd.f32 %v310, %v1121
      %v1123 = vpop.f32.mrb[0].mxu0
      %v1124 = vpop.f32.mrb[0].mxu0
      %v1125 = vadd.f32 %v310, %v1124
      %v1126 = vpop.f32.mrb[0].mxu0
      %1127 = vmatprep.mubr.bf16.mxu0 0
      %1128 = vmatmul.mubr.bf16.gmra.mrb[0].mxu0 %v739
      %v1129 = vpop.f32.mrb[0].mxu0
      %v1130 = vadd.f32 %v310, %v1129
      %v1131 = vpop.f32.mrb[0].mxu0
      %v1132 = vpop.f32.mrb[0].mxu0
      %v1133 = vadd.f32 %v310, %v1132
      %v1134 = vpop.f32.mrb[0].mxu0
      %1135 = vmatprep.mubr.bf16.mxu0 0
      %1136 = vmatmul.mubr.bf16.gmra.mrb[0].mxu0 %v742
      %v1137 = vpop.f32.mrb[0].mxu0
      %v1138 = vadd.f32 %v310, %v1137
      %v1139 = vpop.f32.mrb[0].mxu0
      %v1140 = vpop.f32.mrb[0].mxu0
      %v1141 = vadd.f32 %v310, %v1140
      %v1142 = vpop.f32.mrb[0].mxu0
      %1143 = vmatprep.mubr.bf16.mxu0 0
      %1144 = vmatmul.mubr.bf16.gmra.mrb[0].mxu0 %v745
      %v1145 = vpop.f32.mrb[0].mxu0
      %v1146 = vadd.f32 %v310, %v1145
      %v1147 = vpop.f32.mrb[0].mxu0
      %v1148 = vpop.f32.mrb[0].mxu0
      %v1149 = vadd.f32 %v310, %v1148
      %v1150 = vpop.f32.mrb[0].mxu0
      %1151 = vmatprep.mubr.bf16.mxu0 0
      %1152 = vmatmul.mubr.bf16.gmra.mrb[0].mxu0 %v748
      %v1153 = vpop.f32.mrb[0].mxu0
      %v1154 = vadd.f32 %v310, %v1153
      %v1155 = vpop.f32.mrb[0].mxu0
      %v1156 = vpop.f32.mrb[0].mxu0
      %v1157 = vadd.f32 %v310, %v1156
      %v1158 = vpop.f32.mrb[0].mxu0
      %1159 = vmatprep.mubr.bf16.mxu0 0
      %1160 = vmatmul.mubr.bf16.gmra.mrb[0].mxu0 %v751
      %v1161 = vpop.f32.mrb[0].mxu0
      %v1162 = vadd.f32 %v310, %v1161
      %v1163 = vpop.f32.mrb[0].mxu0
      %v1164 = vpop.f32.mrb[0].mxu0
      %v1165 = vadd.f32 %v310, %v1164
      %v1166 = vpop.f32.mrb[0].mxu0
      %1167 = vmatprep.mubr.bf16.mxu0 0
      %1168 = vmatmul.mubr.bf16.gmra.mrb[0].mxu0 %v754
      %v1169 = vpop.f32.mrb[0].mxu0
      %v1170 = vadd.f32 %v310, %v1169
      %v1171 = vpop.f32.mrb[0].mxu0
      %v1172 = vpop.f32.mrb[0].mxu0
      %v1173 = vadd.f32 %v310, %v1172
      %v1174 = vpop.f32.mrb[0].mxu0
      %1175 = vmatprep.mubr.bf16.mxu0 0
      %1176 = vmatmul.mubr.bf16.gmra.mrb[0].mxu0 %v757
      %v1177 = vpop.f32.mrb[0].mxu0
      %v1178 = vadd.f32 %v310, %v1177
      %v1179 = vpop.f32.mrb[0].mxu0
      %v1180 = vpop.f32.mrb[0].mxu0
      %v1181 = vadd.f32 %v310, %v1180
      %v1182 = vpop.f32.mrb[0].mxu0
      %1183 = vmatprep.mubr.bf16.mxu0 0
      %1184 = vmatmul.mubr.bf16.gmra.mrb[0].mxu0 %v760
      %v1185 = vpop.f32.mrb[0].mxu0
      %v1186 = vadd.f32 %v310, %v1185
      %v1187 = vpop.f32.mrb[0].mxu0
      %v1188 = vpop.f32.mrb[0].mxu0
      %v1189 = vadd.f32 %v310, %v1188
      %v1190 = vpop.f32.mrb[0].mxu0
      %1191 = vmatprep.mubr.bf16.mxu0 0
      %1192 = vmatmul.mubr.bf16.gmra.mrb[0].mxu0 %v763
      %v1193 = vpop.f32.mrb[0].mxu0
      %v1194 = vadd.f32 %v310, %v1193
      %v1195 = vpop.f32.mrb[0].mxu0
      %v1196 = vpop.f32.mrb[0].mxu0
      %v1197 = vadd.f32 %v310, %v1196
      %v1198 = vpop.f32.mrb[0].mxu0
      %1199 = vmatprep.mubr.bf16.mxu0 0
      %1200 = vmatmul.mubr.bf16.gmra.mrb[0].mxu0 %v766
      %v1201 = vpop.f32.mrb[0].mxu0
      %v1202 = vadd.f32 %v310, %v1201
      %v1203 = vpop.f32.mrb[0].mxu0
      %v1204 = vpop.f32.mrb[0].mxu0
      %v1205 = vadd.f32 %v310, %v1204
      %v1206 = vpop.f32.mrb[0].mxu0
      %1207 = vmatprep.mubr.bf16.mxu0 0
      %1208 = vmatmul.mubr.bf16.gmra.mrb[0].mxu0 %v769
      %v1209 = vpop.f32.mrb[0].mxu0
      %v1210 = vadd.f32 %v310, %v1209
      %v1211 = vpop.f32.mrb[0].mxu0
      %v1212 = vpop.f32.mrb[0].mxu0
      %v1213 = vadd.f32 %v310, %v1212
      %v1214 = vpop.f32.mrb[0].mxu0
      %1215 = vmatprep.mubr.bf16.mxu0 0
      %1216 = vmatmul.mubr.bf16.gmra.mrb[0].mxu0 %v772
      %v1217 = vpop.f32.mrb[0].mxu0
      %v1218 = vadd.f32 %v310, %v1217
      %v1219 = vpop.f32.mrb[0].mxu0
      %v1220 = vpop.f32.mrb[0].mxu0
      %v1221 = vadd.f32 %v310, %v1220
      %v1222 = vpop.f32.mrb[0].mxu0
      %1223 = vmatprep.mubr.bf16.mxu0 0
      %1224 = vmatmul.mubr.bf16.gmra.mrb[0].mxu0 %v775
      %v1225 = vpop.f32.mrb[0].mxu0
      %v1226 = vadd.f32 %v310, %v1225
      %v1227 = vpop.f32.mrb[0].mxu0
      %v1228 = vpop.f32.mrb[0].mxu0
      %v1229 = vadd.f32 %v310, %v1228
      %v1230 = vpop.f32.mrb[0].mxu0
      %1231 = vmatprep.mubr.bf16.mxu0 0
      %1232 = vmatmul.mubr.bf16.gmra.mrb[0].mxu0 %v778
      %v1233 = vpop.f32.mrb[0].mxu0
      %v1234 = vadd.f32 %v310, %v1233
      %v1235 = vpop.f32.mrb[0].mxu0
      %v1236 = vpop.f32.mrb[0].mxu0
      %v1237 = vadd.f32 %v310, %v1236
      %v1238 = vpop.f32.mrb[0].mxu0
      %1239 = vmatprep.mubr.bf16.mxu0 0
      %1240 = vmatmul.mubr.bf16.gmra.mrb[0].mxu0 %v781
      %v1241 = vpop.f32.mrb[0].mxu0
      %v1242 = vadd.f32 %v310, %v1241
      %v1243 = vpop.f32.mrb[0].mxu0
      %v1244 = vpop.f32.mrb[0].mxu0
      %v1245 = vadd.f32 %v310, %v1244
      %v1246 = vpop.f32.mrb[0].mxu0
      %1247 = vmatprep.mubr.bf16.mxu0 0
      %1248 = vmatmul.mubr.bf16.gmra.mrb[0].mxu0 %v784
      %v1249 = vpop.f32.mrb[0].mxu0
      %v1250 = vadd.f32 %v310, %v1249
      %v1251 = vpop.f32.mrb[0].mxu0
      %v1252 = vpop.f32.mrb[0].mxu0
      %v1253 = vadd.f32 %v310, %v1252
      %v1254 = vpop.f32.mrb[0].mxu0
      %1255 = vmatprep.mubr.bf16.mxu0 0
      %1256 = vmatmul.mubr.bf16.gmra.mrb[0].mxu0 %v787
      %v1257 = vpop.f32.mrb[0].mxu0
      %v1258 = vadd.f32 %v310, %v1257
      %v1259 = vpop.f32.mrb[0].mxu0
      %v1260 = vpop.f32.mrb[0].mxu0
      %v1261 = vadd.f32 %v310, %v1260
      %v1262 = vpop.f32.mrb[0].mxu0
      %1263 = vmatprep.mubr.bf16.mxu0 0
      %1264 = vmatmul.mubr.bf16.gmra.mrb[0].mxu0 %v790
      %v1265 = vpop.f32.mrb[0].mxu0
      %v1266 = vadd.f32 %v310, %v1265
      %v1267 = vpop.f32.mrb[0].mxu0
      %v1268 = vpop.f32.mrb[0].mxu0
      %v1269 = vadd.f32 %v310, %v1268
      %v1270 = vpop.f32.mrb[0].mxu0
      %1271 = vmatprep.mubr.bf16.mxu0 0
      %1272 = vmatmul.mubr.bf16.gmra.mrb[0].mxu0 %v793
      %v1273 = vpop.f32.mrb[0].mxu0
      %v1274 = vadd.f32 %v310, %v1273
      %v1275 = vpop.f32.mrb[0].mxu0
      %v1276 = vpop.f32.mrb[0].mxu0
      %v1277 = vadd.f32 %v310, %v1276
      %v1278 = vpop.f32.mrb[0].mxu0
      %1279 = vmatprep.mubr.bf16.mxu0 0
      %1280 = vmatmul.mubr.bf16.gmra.mrb[0].mxu0 %v796
      %v1281 = vpop.f32.mrb[0].mxu0
      %v1282 = vadd.f32 %v310, %v1281
      %v1283 = vpop.f32.mrb[0].mxu0
      %v1284 = vpop.f32.mrb[0].mxu0
      %v1285 = vadd.f32 %v310, %v1284
      %v1286 = vpop.f32.mrb[0].mxu0
      %1287 = vmatprep.mubr.bf16.mxu0 0
      %1288 = vmatmul.mubr.bf16.gmra.mrb[0].mxu0 %v799
      %v1289 = vpop.f32.mrb[0].mxu0
      %v1290 = vadd.f32 %v310, %v1289
      %v1291 = vpop.f32.mrb[0].mxu0
      %v1292 = vpop.f32.mrb[0].mxu0
      %v1293 = vadd.f32 %v310, %v1292
      %v1294 = vpop.f32.mrb[0].mxu0
      %1295 = vmatprep.mubr.bf16.mxu0 0
      %1296 = vmatmul.mubr.bf16.gmra.mrb[0].mxu0 %v802
      %v1297 = vpop.f32.mrb[0].mxu0
      %v1298 = vadd.f32 %v310, %v1297
      %v1299 = vpop.f32.mrb[0].mxu0
      %v1300 = vpop.f32.mrb[0].mxu0
      %v1301 = vadd.f32 %v310, %v1300
      %v1302 = vpop.f32.mrb[0].mxu0
      %1303 = vmatprep.mubr.bf16.mxu0 0
      %1304 = vmatmul.mubr.bf16.gmra.mrb[0].mxu0 %v805
      %v1305 = vpop.f32.mrb[0].mxu0
      %v1306 = vadd.f32 %v310, %v1305
      %v1307 = vpop.f32.mrb[0].mxu0
      %v1308 = vpop.f32.mrb[0].mxu0
      %v1309 = vadd.f32 %v310, %v1308
      %v1310 = vpop.f32.mrb[0].mxu0
      %1311 = vmatprep.mubr.bf16.mxu0 0
      %1312 = vmatmul.mubr.bf16.gmra.mrb[0].mxu0 %v808
      %v1313 = vpop.f32.mrb[0].mxu0
      %v1314 = vadd.f32 %v310, %v1313
      %v1315 = vpop.f32.mrb[0].mxu0
      %v1316 = vpop.f32.mrb[0].mxu0
      %v1317 = vadd.f32 %v310, %v1316
      %v1318 = vpop.f32.mrb[0].mxu0
      %1319 = vmatprep.mubr.bf16.mxu0 0
      %1320 = vmatmul.mubr.bf16.gmra.mrb[0].mxu0 %v811
      %v1321 = vpop.f32.mrb[0].mxu0
      %v1322 = vadd.f32 %v310, %v1321
      %v1323 = vpop.f32.mrb[0].mxu0
      %v1324 = vpop.f32.mrb[0].mxu0
      %v1325 = vadd.f32 %v310, %v1324
      %v1326 = vpop.f32.mrb[0].mxu0
      %1327 = vmatprep.mubr.bf16.mxu0 0
      %1328 = vmatmul.mubr.bf16.gmra.mrb[0].mxu0 %v814
      %v1329 = vpop.f32.mrb[0].mxu0
      %v1330 = vadd.f32 %v310, %v1329
      %v1331 = vpop.f32.mrb[0].mxu0
      %v1332 = vpop.f32.mrb[0].mxu0
      %v1333 = vadd.f32 %v310, %v1332
      %v1334 = vpop.f32.mrb[0].mxu0
      %1335 = vmatprep.mubr.bf16.mxu0 0
      %1336 = vmatmul.mubr.bf16.gmra.mrb[0].mxu0 %v817
      %v1337 = vpop.f32.mrb[0].mxu0
      %v1338 = vadd.f32 %v310, %v1337
      %v1339 = vpop.f32.mrb[0].mxu0
      %v1340 = vpop.f32.mrb[0].mxu0
      %v1341 = vadd.f32 %v310, %v1340
      %v1342 = vpop.f32.mrb[0].mxu0
      %1343 = vmatprep.mubr.bf16.mxu0 0
      %1344 = vmatmul.mubr.bf16.gmra.mrb[0].mxu0 %v820
      %v1345 = vpop.f32.mrb[0].mxu0
      %v1346 = vadd.f32 %v310, %v1345
      %v1347 = vpop.f32.mrb[0].mxu0
      %v1348 = vpop.f32.mrb[0].mxu0
      %v1349 = vadd.f32 %v310, %v1348
      %v1350 = vpop.f32.mrb[0].mxu0
      %1351 = vmatprep.mubr.bf16.mxu0 0
      %1352 = vmatmul.mubr.bf16.gmra.mrb[0].mxu0 %v823
      %v1353 = vpop.f32.mrb[0].mxu0
      %v1354 = vadd.f32 %v310, %v1353
      %v1355 = vpop.f32.mrb[0].mxu0
      %v1356 = vpop.f32.mrb[0].mxu0
      %v1357 = vadd.f32 %v310, %v1356
      %v1358 = vpop.f32.mrb[0].mxu0
      %1359 = vmatprep.mubr.bf16.mxu0 0
      %1360 = vmatmul.mubr.bf16.gmra.mrb[0].mxu0 %v826
      %v1361 = vpop.f32.mrb[0].mxu0
      %v1362 = vadd.f32 %v310, %v1361
      %v1363 = vpop.f32.mrb[0].mxu0
      %v1364 = vpop.f32.mrb[0].mxu0
      %v1365 = vadd.f32 %v310, %v1364
      %v1366 = vpop.f32.mrb[0].mxu0
      %1367 = vmatprep.mubr.bf16.mxu0 0
      %1368 = vmatmul.mubr.bf16.gmra.mrb[0].mxu0 %v829
      %v1369 = vpop.f32.mrb[0].mxu0
      %v1370 = vadd.f32 %v310, %v1369
      %v1371 = vpop.f32.mrb[0].mxu0
      %v1372 = vpop.f32.mrb[0].mxu0
      %v1373 = vadd.f32 %v310, %v1372
      %v1374 = vpop.f32.mrb[0].mxu0
      %1375 = vdwg.mxu0
      %v1376 = vmax.f32 %v866, 0.0
      %v1377 = vmax.f32 %v869, 0.0
      %v1378 = vmax.f32 %v874, 0.0
      %v1379 = vmax.f32 %v877, 0.0
      %v1380 = vmax.f32 %v882, 0.0
      %v1381 = vmax.f32 %v885, 0.0
      %v1382 = vmax.f32 %v890, 0.0
      %v1383 = vmax.f32 %v893, 0.0
      %v1384 = vmax.f32 %v898, 0.0
      %v1385 = vmax.f32 %v901, 0.0
      %v1386 = vmax.f32 %v906, 0.0
      %v1387 = vmax.f32 %v909, 0.0
      %v1388 = vmax.f32 %v914, 0.0
      %v1389 = vmax.f32 %v917, 0.0
      %v1390 = vmax.f32 %v922, 0.0
      %v1391 = vmax.f32 %v925, 0.0
      %v1392 = vmax.f32 %v930, 0.0
      %v1393 = vmax.f32 %v933, 0.0
      %v1394 = vmax.f32 %v938, 0.0
      %v1395 = vmax.f32 %v941, 0.0
      %v1396 = vmax.f32 %v946, 0.0
      %v1397 = vmax.f32 %v949, 0.0
      %v1398 = vmax.f32 %v954, 0.0
      %v1399 = vmax.f32 %v957, 0.0
      %v1400 = vmax.f32 %v962, 0.0
      %v1401 = vmax.f32 %v965, 0.0
      %v1402 = vmax.f32 %v970, 0.0
      %v1403 = vmax.f32 %v973, 0.0
      %v1404 = vmax.f32 %v978, 0.0
      %v1405 = vmax.f32 %v981, 0.0
      %v1406 = vmax.f32 %v986, 0.0
      %v1407 = vmax.f32 %v989, 0.0
      %v1408 = vmax.f32 %v994, 0.0
      %v1409 = vmax.f32 %v997, 0.0
      %v1410 = vmax.f32 %v1002, 0.0
      %v1411 = vmax.f32 %v1005, 0.0
      %v1412 = vmax.f32 %v1010, 0.0
      %v1413 = vmax.f32 %v1013, 0.0
      %v1414 = vmax.f32 %v1018, 0.0
      %v1415 = vmax.f32 %v1021, 0.0
      %v1416 = vmax.f32 %v1026, 0.0
      %v1417 = vmax.f32 %v1029, 0.0
      %v1418 = vmax.f32 %v1034, 0.0
      %v1419 = vmax.f32 %v1037, 0.0
      %v1420 = vmax.f32 %v1042, 0.0
      %v1421 = vmax.f32 %v1045, 0.0
      %v1422 = vmax.f32 %v1050, 0.0
      %v1423 = vmax.f32 %v1053, 0.0
      %v1424 = vmax.f32 %v1058, 0.0
      %v1425 = vmax.f32 %v1061, 0.0
      %v1426 = vmax.f32 %v1066, 0.0
      %v1427 = vmax.f32 %v1069, 0.0
      %v1428 = vmax.f32 %v1074, 0.0
      %v1429 = vmax.f32 %v1077, 0.0
      %v1430 = vmax.f32 %v1082, 0.0
      %v1431 = vmax.f32 %v1085, 0.0
      %v1432 = vmax.f32 %v1090, 0.0
      %v1433 = vmax.f32 %v1093, 0.0
      %v1434 = vmax.f32 %v1098, 0.0
      %v1435 = vmax.f32 %v1101, 0.0
      %v1436 = vmax.f32 %v1106, 0.0
      %v1437 = vmax.f32 %v1109, 0.0
      %v1438 = vmax.f32 %v1114, 0.0
      %v1439 = vmax.f32 %v1117, 0.0
      %v1440 = vmax.f32 %v1122, 0.0
      %v1441 = vmax.f32 %v1125, 0.0
      %v1442 = vmax.f32 %v1130, 0.0
      %v1443 = vmax.f32 %v1133, 0.0
      %v1444 = vmax.f32 %v1138, 0.0
      %v1445 = vmax.f32 %v1141, 0.0
      %v1446 = vmax.f32 %v1146, 0.0
      %v1447 = vmax.f32 %v1149, 0.0
      %v1448 = vmax.f32 %v1154, 0.0
      %v1449 = vmax.f32 %v1157, 0.0
      %v1450 = vmax.f32 %v1162, 0.0
      %v1451 = vmax.f32 %v1165, 0.0
      %v1452 = vmax.f32 %v1170, 0.0
      %v1453 = vmax.f32 %v1173, 0.0
      %v1454 = vmax.f32 %v1178, 0.0
      %v1455 = vmax.f32 %v1181, 0.0
      %v1456 = vmax.f32 %v1186, 0.0
      %v1457 = vmax.f32 %v1189, 0.0
      %v1458 = vmax.f32 %v1194, 0.0
      %v1459 = vmax.f32 %v1197, 0.0
      %v1460 = vmax.f32 %v1202, 0.0
      %v1461 = vmax.f32 %v1205, 0.0
      %v1462 = vmax.f32 %v1210, 0.0
      %v1463 = vmax.f32 %v1213, 0.0
      %v1464 = vmax.f32 %v1218, 0.0
      %v1465 = vmax.f32 %v1221, 0.0
      %v1466 = vmax.f32 %v1226, 0.0
      %v1467 = vmax.f32 %v1229, 0.0
      %v1468 = vmax.f32 %v1234, 0.0
      %v1469 = vmax.f32 %v1237, 0.0
      %v1470 = vmax.f32 %v1242, 0.0
      %v1471 = vmax.f32 %v1245, 0.0
      %v1472 = vmax.f32 %v1250, 0.0
      %v1473 = vmax.f32 %v1253, 0.0
      %v1474 = vmax.f32 %v1258, 0.0
      %v1475 = vmax.f32 %v1261, 0.0
      %v1476 = vmax.f32 %v1266, 0.0
      %v1477 = vmax.f32 %v1269, 0.0
      %v1478 = vmax.f32 %v1274, 0.0
      %v1479 = vmax.f32 %v1277, 0.0
      %v1480 = vmax.f32 %v1282, 0.0
      %v1481 = vmax.f32 %v1285, 0.0
      %v1482 = vmax.f32 %v1290, 0.0
      %v1483 = vmax.f32 %v1293, 0.0
      %v1484 = vmax.f32 %v1298, 0.0
      %v1485 = vmax.f32 %v1301, 0.0
      %v1486 = vmax.f32 %v1306, 0.0
      %v1487 = vmax.f32 %v1309, 0.0
      %v1488 = vmax.f32 %v1314, 0.0
      %v1489 = vmax.f32 %v1317, 0.0
      %v1490 = vmax.f32 %v1322, 0.0
      %v1491 = vmax.f32 %v1325, 0.0
      %v1492 = vmax.f32 %v1330, 0.0
      %v1493 = vmax.f32 %v1333, 0.0
      %v1494 = vmax.f32 %v1338, 0.0
      %v1495 = vmax.f32 %v1341, 0.0
      %v1496 = vmax.f32 %v1346, 0.0
      %v1497 = vmax.f32 %v1349, 0.0
      %v1498 = vmax.f32 %v1354, 0.0
      %v1499 = vmax.f32 %v1357, 0.0
      %v1500 = vmax.f32 %v1362, 0.0
      %v1501 = vmax.f32 %v1365, 0.0
      %v1502 = vmax.f32 %v1370, 0.0
      %v1503 = vmax.f32 %v1373, 0.0
      %v1504 = vpack.c.bf16 %v1377, %v1376
      %v1505 = vpack.c.bf16 %v1379, %v1378
      %v1506 = vpack.c.bf16 %v1381, %v1380
      %v1507 = vpack.c.bf16 %v1383, %v1382
      %v1508 = vpack.c.bf16 %v1385, %v1384
      %v1509 = vpack.c.bf16 %v1387, %v1386
      %v1510 = vpack.c.bf16 %v1389, %v1388
      %v1511 = vpack.c.bf16 %v1391, %v1390
      %v1512 = vpack.c.bf16 %v1393, %v1392
      %v1513 = vpack.c.bf16 %v1395, %v1394
      %v1514 = vpack.c.bf16 %v1397, %v1396
      %v1515 = vpack.c.bf16 %v1399, %v1398
      %v1516 = vpack.c.bf16 %v1401, %v1400
      %v1517 = vpack.c.bf16 %v1403, %v1402
      %v1518 = vpack.c.bf16 %v1405, %v1404
      %v1519 = vpack.c.bf16 %v1407, %v1406
      %v1520 = vpack.c.bf16 %v1409, %v1408
      %v1521 = vpack.c.bf16 %v1411, %v1410
      %v1522 = vpack.c.bf16 %v1413, %v1412
      %v1523 = vpack.c.bf16 %v1415, %v1414
      %v1524 = vpack.c.bf16 %v1417, %v1416
      %v1525 = vpack.c.bf16 %v1419, %v1418
      %v1526 = vpack.c.bf16 %v1421, %v1420
      %v1527 = vpack.c.bf16 %v1423, %v1422
      %v1528 = vpack.c.bf16 %v1425, %v1424
      %v1529 = vpack.c.bf16 %v1427, %v1426
      %v1530 = vpack.c.bf16 %v1429, %v1428
      %v1531 = vpack.c.bf16 %v1431, %v1430
      %v1532 = vpack.c.bf16 %v1433, %v1432
      %v1533 = vpack.c.bf16 %v1435, %v1434
      %v1534 = vpack.c.bf16 %v1437, %v1436
      %v1535 = vpack.c.bf16 %v1439, %v1438
      %v1536 = vpack.c.bf16 %v1441, %v1440
      %v1537 = vpack.c.bf16 %v1443, %v1442
      %v1538 = vpack.c.bf16 %v1445, %v1444
      %v1539 = vpack.c.bf16 %v1447, %v1446
      %v1540 = vpack.c.bf16 %v1449, %v1448
      %v1541 = vpack.c.bf16 %v1451, %v1450
      %v1542 = vpack.c.bf16 %v1453, %v1452
      %v1543 = vpack.c.bf16 %v1455, %v1454
      %v1544 = vpack.c.bf16 %v1457, %v1456
      %v1545 = vpack.c.bf16 %v1459, %v1458
      %v1546 = vpack.c.bf16 %v1461, %v1460
      %v1547 = vpack.c.bf16 %v1463, %v1462
      %v1548 = vpack.c.bf16 %v1465, %v1464
      %v1549 = vpack.c.bf16 %v1467, %v1466
      %v1550 = vpack.c.bf16 %v1469, %v1468
      %v1551 = vpack.c.bf16 %v1471, %v1470
      %v1552 = vpack.c.bf16 %v1473, %v1472
      %v1553 = vpack.c.bf16 %v1475, %v1474
      %v1554 = vpack.c.bf16 %v1477, %v1476
      %v1555 = vpack.c.bf16 %v1479, %v1478
      %v1556 = vpack.c.bf16 %v1481, %v1480
      %v1557 = vpack.c.bf16 %v1483, %v1482
      %v1558 = vpack.c.bf16 %v1485, %v1484
      %v1559 = vpack.c.bf16 %v1487, %v1486
      %v1560 = vpack.c.bf16 %v1489, %v1488
      %v1561 = vpack.c.bf16 %v1491, %v1490
      %v1562 = vpack.c.bf16 %v1493, %v1492
      %v1563 = vpack.c.bf16 %v1495, %v1494
      %v1564 = vpack.c.bf16 %v1497, %v1496
      %v1565 = vpack.c.bf16 %v1499, %v1498
      %v1566 = vpack.c.bf16 %v1501, %v1500
      %v1567 = vpack.c.bf16 %v1503, %v1502
      %v1632 = vunpack.c.l.b16 %v1504
      %v1633 = vunpack.c.h.b16 %v1504
      %v1634 = vunpack.c.l.b16 %v1505
      %v1635 = vunpack.c.h.b16 %v1505
      %v1636 = vunpack.c.l.b16 %v1506
      %v1637 = vunpack.c.h.b16 %v1506
      %v1638 = vunpack.c.l.b16 %v1507
      %v1639 = vunpack.c.h.b16 %v1507
      %v1640 = vunpack.c.l.b16 %v1508
      %v1641 = vunpack.c.h.b16 %v1508
      %v1642 = vunpack.c.l.b16 %v1509
      %v1643 = vunpack.c.h.b16 %v1509
      %v1644 = vunpack.c.l.b16 %v1510
      %v1645 = vunpack.c.h.b16 %v1510
      %v1646 = vunpack.c.l.b16 %v1511
      %v1647 = vunpack.c.h.b16 %v1511
      %v1648 = vunpack.c.l.b16 %v1512
      %v1649 = vunpack.c.h.b16 %v1512
      %v1650 = vunpack.c.l.b16 %v1513
      %v1651 = vunpack.c.h.b16 %v1513
      %v1652 = vunpack.c.l.b16 %v1514
      %v1653 = vunpack.c.h.b16 %v1514
      %v1654 = vunpack.c.l.b16 %v1515
      %v1655 = vunpack.c.h.b16 %v1515
      %v1656 = vunpack.c.l.b16 %v1516
      %v1657 = vunpack.c.h.b16 %v1516
      %v1658 = vunpack.c.l.b16 %v1517
      %v1659 = vunpack.c.h.b16 %v1517
      %v1660 = vunpack.c.l.b16 %v1518
      %v1661 = vunpack.c.h.b16 %v1518
      %v1662 = vunpack.c.l.b16 %v1519
      %v1663 = vunpack.c.h.b16 %v1519
      %v1664 = vunpack.c.l.b16 %v1520
      %v1665 = vunpack.c.h.b16 %v1520
      %v1666 = vunpack.c.l.b16 %v1521
      %v1667 = vunpack.c.h.b16 %v1521
      %v1668 = vunpack.c.l.b16 %v1522
      %v1669 = vunpack.c.h.b16 %v1522
      %v1670 = vunpack.c.l.b16 %v1523
      %v1671 = vunpack.c.h.b16 %v1523
      %v1672 = vunpack.c.l.b16 %v1524
      %v1673 = vunpack.c.h.b16 %v1524
      %v1674 = vunpack.c.l.b16 %v1525
      %v1675 = vunpack.c.h.b16 %v1525
      %v1676 = vunpack.c.l.b16 %v1526
      %v1677 = vunpack.c.h.b16 %v1526
      %v1678 = vunpack.c.l.b16 %v1527
      %v1679 = vunpack.c.h.b16 %v1527
      %v1680 = vunpack.c.l.b16 %v1528
      %v1681 = vunpack.c.h.b16 %v1528
      %v1682 = vunpack.c.l.b16 %v1529
      %v1683 = vunpack.c.h.b16 %v1529
      %v1684 = vunpack.c.l.b16 %v1530
      %v1685 = vunpack.c.h.b16 %v1530
      %v1686 = vunpack.c.l.b16 %v1531
      %v1687 = vunpack.c.h.b16 %v1531
      %v1688 = vunpack.c.l.b16 %v1532
      %v1689 = vunpack.c.h.b16 %v1532
      %v1690 = vunpack.c.l.b16 %v1533
      %v1691 = vunpack.c.h.b16 %v1533
      %v1692 = vunpack.c.l.b16 %v1534
      %v1693 = vunpack.c.h.b16 %v1534
      %v1694 = vunpack.c.l.b16 %v1535
      %v1695 = vunpack.c.h.b16 %v1535
      %v1696 = vunpack.c.l.b16 %v1536
      %v1697 = vunpack.c.h.b16 %v1536
      %v1698 = vunpack.c.l.b16 %v1537
      %v1699 = vunpack.c.h.b16 %v1537
      %v1700 = vunpack.c.l.b16 %v1538
      %v1701 = vunpack.c.h.b16 %v1538
      %v1702 = vunpack.c.l.b16 %v1539
      %v1703 = vunpack.c.h.b16 %v1539
      %v1704 = vunpack.c.l.b16 %v1540
      %v1705 = vunpack.c.h.b16 %v1540
      %v1706 = vunpack.c.l.b16 %v1541
      %v1707 = vunpack.c.h.b16 %v1541
      %v1708 = vunpack.c.l.b16 %v1542
      %v1709 = vunpack.c.h.b16 %v1542
      %v1710 = vunpack.c.l.b16 %v1543
      %v1711 = vunpack.c.h.b16 %v1543
      %v1712 = vunpack.c.l.b16 %v1544
      %v1713 = vunpack.c.h.b16 %v1544
      %v1714 = vunpack.c.l.b16 %v1545
      %v1715 = vunpack.c.h.b16 %v1545
      %v1716 = vunpack.c.l.b16 %v1546
      %v1717 = vunpack.c.h.b16 %v1546
      %v1718 = vunpack.c.l.b16 %v1547
      %v1719 = vunpack.c.h.b16 %v1547
      %v1720 = vunpack.c.l.b16 %v1548
      %v1721 = vunpack.c.h.b16 %v1548
      %v1722 = vunpack.c.l.b16 %v1549
      %v1723 = vunpack.c.h.b16 %v1549
      %v1724 = vunpack.c.l.b16 %v1550
      %v1725 = vunpack.c.h.b16 %v1550
      %v1726 = vunpack.c.l.b16 %v1551
      %v1727 = vunpack.c.h.b16 %v1551
      %v1728 = vunpack.c.l.b16 %v1552
      %v1729 = vunpack.c.h.b16 %v1552
      %v1730 = vunpack.c.l.b16 %v1553
      %v1731 = vunpack.c.h.b16 %v1553
      %v1732 = vunpack.c.l.b16 %v1554
      %v1733 = vunpack.c.h.b16 %v1554
      %v1734 = vunpack.c.l.b16 %v1555
      %v1735 = vunpack.c.h.b16 %v1555
      %v1736 = vunpack.c.l.b16 %v1556
      %v1737 = vunpack.c.h.b16 %v1556
      %v1738 = vunpack.c.l.b16 %v1557
      %v1739 = vunpack.c.h.b16 %v1557
      %v1740 = vunpack.c.l.b16 %v1558
      %v1741 = vunpack.c.h.b16 %v1558
      %v1742 = vunpack.c.l.b16 %v1559
      %v1743 = vunpack.c.h.b16 %v1559
      %v1744 = vunpack.c.l.b16 %v1560
      %v1745 = vunpack.c.h.b16 %v1560
      %v1746 = vunpack.c.l.b16 %v1561
      %v1747 = vunpack.c.h.b16 %v1561
      %v1748 = vunpack.c.l.b16 %v1562
      %v1749 = vunpack.c.h.b16 %v1562
      %v1750 = vunpack.c.l.b16 %v1563
      %v1751 = vunpack.c.h.b16 %v1563
      %v1752 = vunpack.c.l.b16 %v1564
      %v1753 = vunpack.c.h.b16 %v1564
      %v1754 = vunpack.c.l.b16 %v1565
      %v1755 = vunpack.c.h.b16 %v1565
      %v1756 = vunpack.c.l.b16 %v1566
      %v1757 = vunpack.c.h.b16 %v1566
      %v1758 = vunpack.c.l.b16 %v1567
      %v1759 = vunpack.c.h.b16 %v1567
      %v1760 = vpack.c.b16 %v1632, %v1632
      %v1761 = vpack.c.b16 %v1633, %v1633
      %v1762 = vpack.c.b16 %v1634, %v1634
      %v1763 = vpack.c.b16 %v1635, %v1635
      %v1764 = vpack.c.b16 %v1636, %v1636
      %v1765 = vpack.c.b16 %v1637, %v1637
      %v1766 = vpack.c.b16 %v1638, %v1638
      %v1767 = vpack.c.b16 %v1639, %v1639
      %v1768 = vpack.c.b16 %v1640, %v1640
      %v1769 = vpack.c.b16 %v1641, %v1641
      %v1770 = vpack.c.b16 %v1642, %v1642
      %v1771 = vpack.c.b16 %v1643, %v1643
      %v1772 = vpack.c.b16 %v1644, %v1644
      %v1773 = vpack.c.b16 %v1645, %v1645
      %v1774 = vpack.c.b16 %v1646, %v1646
      %v1775 = vpack.c.b16 %v1647, %v1647
      %v1776 = vpack.c.b16 %v1648, %v1648
      %v1777 = vpack.c.b16 %v1649, %v1649
      %v1778 = vpack.c.b16 %v1650, %v1650
      %v1779 = vpack.c.b16 %v1651, %v1651
      %v1780 = vpack.c.b16 %v1652, %v1652
      %v1781 = vpack.c.b16 %v1653, %v1653
      %v1782 = vpack.c.b16 %v1654, %v1654
      %v1783 = vpack.c.b16 %v1655, %v1655
      %v1784 = vpack.c.b16 %v1656, %v1656
      %v1785 = vpack.c.b16 %v1657, %v1657
      %v1786 = vpack.c.b16 %v1658, %v1658
      %v1787 = vpack.c.b16 %v1659, %v1659
      %v1788 = vpack.c.b16 %v1660, %v1660
      %v1789 = vpack.c.b16 %v1661, %v1661
      %v1790 = vpack.c.b16 %v1662, %v1662
      %v1791 = vpack.c.b16 %v1663, %v1663
      %v1792 = vpack.c.b16 %v1664, %v1664
      %v1793 = vpack.c.b16 %v1665, %v1665
      %v1794 = vpack.c.b16 %v1666, %v1666
      %v1795 = vpack.c.b16 %v1667, %v1667
      %v1796 = vpack.c.b16 %v1668, %v1668
      %v1797 = vpack.c.b16 %v1669, %v1669
      %v1798 = vpack.c.b16 %v1670, %v1670
      %v1799 = vpack.c.b16 %v1671, %v1671
      %v1800 = vpack.c.b16 %v1672, %v1672
      %v1801 = vpack.c.b16 %v1673, %v1673
      %v1802 = vpack.c.b16 %v1674, %v1674
      %v1803 = vpack.c.b16 %v1675, %v1675
      %v1804 = vpack.c.b16 %v1676, %v1676
      %v1805 = vpack.c.b16 %v1677, %v1677
      %v1806 = vpack.c.b16 %v1678, %v1678
      %v1807 = vpack.c.b16 %v1679, %v1679
      %v1808 = vpack.c.b16 %v1680, %v1680
      %v1809 = vpack.c.b16 %v1681, %v1681
      %v1810 = vpack.c.b16 %v1682, %v1682
      %v1811 = vpack.c.b16 %v1683, %v1683
      %v1812 = vpack.c.b16 %v1684, %v1684
      %v1813 = vpack.c.b16 %v1685, %v1685
      %v1814 = vpack.c.b16 %v1686, %v1686
      %v1815 = vpack.c.b16 %v1687, %v1687
      %v1816 = vpack.c.b16 %v1688, %v1688
      %v1817 = vpack.c.b16 %v1689, %v1689
      %v1818 = vpack.c.b16 %v1690, %v1690
      %v1819 = vpack.c.b16 %v1691, %v1691
      %v1820 = vpack.c.b16 %v1692, %v1692
      %v1821 = vpack.c.b16 %v1693, %v1693
      %v1822 = vpack.c.b16 %v1694, %v1694
      %v1823 = vpack.c.b16 %v1695, %v1695
      %v1824 = vpack.c.b16 %v1696, %v1696
      %v1825 = vpack.c.b16 %v1697, %v1697
      %v1826 = vpack.c.b16 %v1698, %v1698
      %v1827 = vpack.c.b16 %v1699, %v1699
      %v1828 = vpack.c.b16 %v1700, %v1700
      %v1829 = vpack.c.b16 %v1701, %v1701
      %v1830 = vpack.c.b16 %v1702, %v1702
      %v1831 = vpack.c.b16 %v1703, %v1703
      %v1832 = vpack.c.b16 %v1704, %v1704
      %v1833 = vpack.c.b16 %v1705, %v1705
      %v1834 = vpack.c.b16 %v1706, %v1706
      %v1835 = vpack.c.b16 %v1707, %v1707
      %v1836 = vpack.c.b16 %v1708, %v1708
      %v1837 = vpack.c.b16 %v1709, %v1709
      %v1838 = vpack.c.b16 %v1710, %v1710
      %v1839 = vpack.c.b16 %v1711, %v1711
      %v1840 = vpack.c.b16 %v1712, %v1712
      %v1841 = vpack.c.b16 %v1713, %v1713
      %v1842 = vpack.c.b16 %v1714, %v1714
      %v1843 = vpack.c.b16 %v1715, %v1715
      %v1844 = vpack.c.b16 %v1716, %v1716
      %v1845 = vpack.c.b16 %v1717, %v1717
      %v1846 = vpack.c.b16 %v1718, %v1718
      %v1847 = vpack.c.b16 %v1719, %v1719
      %v1848 = vpack.c.b16 %v1720, %v1720
      %v1849 = vpack.c.b16 %v1721, %v1721
      %v1850 = vpack.c.b16 %v1722, %v1722
      %v1851 = vpack.c.b16 %v1723, %v1723
      %v1852 = vpack.c.b16 %v1724, %v1724
      %v1853 = vpack.c.b16 %v1725, %v1725
      %v1854 = vpack.c.b16 %v1726, %v1726
      %v1855 = vpack.c.b16 %v1727, %v1727
      %v1856 = vpack.c.b16 %v1728, %v1728
      %v1857 = vpack.c.b16 %v1729, %v1729
      %v1858 = vpack.c.b16 %v1730, %v1730
      %v1859 = vpack.c.b16 %v1731, %v1731
      %v1860 = vpack.c.b16 %v1732, %v1732
      %v1861 = vpack.c.b16 %v1733, %v1733
      %v1862 = vpack.c.b16 %v1734, %v1734
      %v1863 = vpack.c.b16 %v1735, %v1735
      %v1864 = vpack.c.b16 %v1736, %v1736
      %v1865 = vpack.c.b16 %v1737, %v1737
      %v1866 = vpack.c.b16 %v1738, %v1738
      %v1867 = vpack.c.b16 %v1739, %v1739
      %v1868 = vpack.c.b16 %v1740, %v1740
      %v1869 = vpack.c.b16 %v1741, %v1741
      %v1870 = vpack.c.b16 %v1742, %v1742
      %v1871 = vpack.c.b16 %v1743, %v1743
      %v1872 = vpack.c.b16 %v1744, %v1744
      %v1873 = vpack.c.b16 %v1745, %v1745
      %v1874 = vpack.c.b16 %v1746, %v1746
      %v1875 = vpack.c.b16 %v1747, %v1747
      %v1876 = vpack.c.b16 %v1748, %v1748
      %v1877 = vpack.c.b16 %v1749, %v1749
      %v1878 = vpack.c.b16 %v1750, %v1750
      %v1879 = vpack.c.b16 %v1751, %v1751
      %v1880 = vpack.c.b16 %v1752, %v1752
      %v1881 = vpack.c.b16 %v1753, %v1753
      %v1882 = vpack.c.b16 %v1754, %v1754
      %v1883 = vpack.c.b16 %v1755, %v1755
      %v1884 = vpack.c.b16 %v1756, %v1756
      %v1885 = vpack.c.b16 %v1757, %v1757
      %v1886 = vpack.c.b16 %v1758, %v1758
      %v1887 = vpack.c.b16 %v1759, %v1759
      %vm2016 = vcmask 27648
      %2017 = vst.msk [vmem:[%s172] sm:$0xf] %vm2016, %v1760
      %2018 = vst.msk [vmem:[%s172 + $0x4] sm:$0xf] %vm2016, %v1761
      %2019 = vst.msk [vmem:[%s172 + $0x8] sm:$0xf] %vm2016, %v1762
      %2020 = vst.msk [vmem:[%s172 + $0xc] sm:$0xf] %vm2016, %v1763
      %2021 = vst.msk [vmem:[%s172 + $0x10] sm:$0xf] %vm2016, %v1764
      %2022 = vst.msk [vmem:[%s172 + $0x14] sm:$0xf] %vm2016, %v1765
      %2023 = vst.msk [vmem:[%s172 + $0x18] sm:$0xf] %vm2016, %v1766
      %2024 = vst.msk [vmem:[%s172 + $0x1c] sm:$0xf] %vm2016, %v1767
      %2025 = vst.msk [vmem:[%s172 + $0x20] sm:$0xf] %vm2016, %v1768
      %2026 = vst.msk [vmem:[%s172 + $0x24] sm:$0xf] %vm2016, %v1769
      %2027 = vst.msk [vmem:[%s172 + $0x28] sm:$0xf] %vm2016, %v1770
      %2028 = vst.msk [vmem:[%s172 + $0x2c] sm:$0xf] %vm2016, %v1771
      %2029 = vst.msk [vmem:[%s172 + $0x30] sm:$0xf] %vm2016, %v1772
      %2030 = vst.msk [vmem:[%s172 + $0x34] sm:$0xf] %vm2016, %v1773
      %2031 = vst.msk [vmem:[%s172 + $0x38] sm:$0xf] %vm2016, %v1774
      %2032 = vst.msk [vmem:[%s172 + $0x3c] sm:$0xf] %vm2016, %v1775
      %2033 = vst.msk [vmem:[%s172 + $0x40] sm:$0xf] %vm2016, %v1776
      %2034 = vst.msk [vmem:[%s172 + $0x44] sm:$0xf] %vm2016, %v1777
      %2035 = vst.msk [vmem:[%s172 + $0x48] sm:$0xf] %vm2016, %v1778
      %2036 = vst.msk [vmem:[%s172 + $0x4c] sm:$0xf] %vm2016, %v1779
      %2037 = vst.msk [vmem:[%s172 + $0x50] sm:$0xf] %vm2016, %v1780
      %2038 = vst.msk [vmem:[%s172 + $0x54] sm:$0xf] %vm2016, %v1781
      %2039 = vst.msk [vmem:[%s172 + $0x58] sm:$0xf] %vm2016, %v1782
      %2040 = vst.msk [vmem:[%s172 + $0x5c] sm:$0xf] %vm2016, %v1783
      %2041 = vst.msk [vmem:[%s172 + $0x60] sm:$0xf] %vm2016, %v1784
      %2042 = vst.msk [vmem:[%s172 + $0x64] sm:$0xf] %vm2016, %v1785
      %2043 = vst.msk [vmem:[%s172 + $0x68] sm:$0xf] %vm2016, %v1786
      %2044 = vst.msk [vmem:[%s172 + $0x6c] sm:$0xf] %vm2016, %v1787
      %2045 = vst.msk [vmem:[%s172 + $0x70] sm:$0xf] %vm2016, %v1788
      %2046 = vst.msk [vmem:[%s172 + $0x74] sm:$0xf] %vm2016, %v1789
      %2047 = vst.msk [vmem:[%s172 + $0x78] sm:$0xf] %vm2016, %v1790
      %2048 = vst.msk [vmem:[%s172 + $0x7c] sm:$0xf] %vm2016, %v1791
      %2049 = vst.msk [vmem:[%s172 + $0x80] sm:$0xf] %vm2016, %v1792
      %2050 = vst.msk [vmem:[%s172 + $0x84] sm:$0xf] %vm2016, %v1793
      %2051 = vst.msk [vmem:[%s172 + $0x88] sm:$0xf] %vm2016, %v1794
      %2052 = vst.msk [vmem:[%s172 + $0x8c] sm:$0xf] %vm2016, %v1795
      %2053 = vst.msk [vmem:[%s172 + $0x90] sm:$0xf] %vm2016, %v1796
      %2054 = vst.msk [vmem:[%s172 + $0x94] sm:$0xf] %vm2016, %v1797
      %2055 = vst.msk [vmem:[%s172 + $0x98] sm:$0xf] %vm2016, %v1798
      %2056 = vst.msk [vmem:[%s172 + $0x9c] sm:$0xf] %vm2016, %v1799
      %2057 = vst.msk [vmem:[%s172 + $0xa0] sm:$0xf] %vm2016, %v1800
      %2058 = vst.msk [vmem:[%s172 + $0xa4] sm:$0xf] %vm2016, %v1801
      %2059 = vst.msk [vmem:[%s172 + $0xa8] sm:$0xf] %vm2016, %v1802
      %2060 = vst.msk [vmem:[%s172 + $0xac] sm:$0xf] %vm2016, %v1803
      %2061 = vst.msk [vmem:[%s172 + $0xb0] sm:$0xf] %vm2016, %v1804
      %2062 = vst.msk [vmem:[%s172 + $0xb4] sm:$0xf] %vm2016, %v1805
      %2063 = vst.msk [vmem:[%s172 + $0xb8] sm:$0xf] %vm2016, %v1806
      %2064 = vst.msk [vmem:[%s172 + $0xbc] sm:$0xf] %vm2016, %v1807
      %2065 = vst.msk [vmem:[%s172 + $0xc0] sm:$0xf] %vm2016, %v1808
      %2066 = vst.msk [vmem:[%s172 + $0xc4] sm:$0xf] %vm2016, %v1809
      %2067 = vst.msk [vmem:[%s172 + $0xc8] sm:$0xf] %vm2016, %v1810
      %2068 = vst.msk [vmem:[%s172 + $0xcc] sm:$0xf] %vm2016, %v1811
      %2069 = vst.msk [vmem:[%s172 + $0xd0] sm:$0xf] %vm2016, %v1812
      %2070 = vst.msk [vmem:[%s172 + $0xd4] sm:$0xf] %vm2016, %v1813
      %2071 = vst.msk [vmem:[%s172 + $0xd8] sm:$0xf] %vm2016, %v1814
      %2072 = vst.msk [vmem:[%s172 + $0xdc] sm:$0xf] %vm2016, %v1815
      %2073 = vst.msk [vmem:[%s172 + $0xe0] sm:$0xf] %vm2016, %v1816
      %2074 = vst.msk [vmem:[%s172 + $0xe4] sm:$0xf] %vm2016, %v1817
      %2075 = vst.msk [vmem:[%s172 + $0xe8] sm:$0xf] %vm2016, %v1818
      %2076 = vst.msk [vmem:[%s172 + $0xec] sm:$0xf] %vm2016, %v1819
      %2077 = vst.msk [vmem:[%s172 + $0xf0] sm:$0xf] %vm2016, %v1820
      %2078 = vst.msk [vmem:[%s172 + $0xf4] sm:$0xf] %vm2016, %v1821
      %2079 = vst.msk [vmem:[%s172 + $0xf8] sm:$0xf] %vm2016, %v1822
      %2080 = vst.msk [vmem:[%s172 + $0xfc] sm:$0xf] %vm2016, %v1823
      %2081 = vst.msk [vmem:[%s172 + $0x100] sm:$0xf] %vm2016, %v1824
      %2082 = vst.msk [vmem:[%s172 + $0x104] sm:$0xf] %vm2016, %v1825
      %2083 = vst.msk [vmem:[%s172 + $0x108] sm:$0xf] %vm2016, %v1826
      %2084 = vst.msk [vmem:[%s172 + $0x10c] sm:$0xf] %vm2016, %v1827
      %2085 = vst.msk [vmem:[%s172 + $0x110] sm:$0xf] %vm2016, %v1828
      %2086 = vst.msk [vmem:[%s172 + $0x114] sm:$0xf] %vm2016, %v1829
      %2087 = vst.msk [vmem:[%s172 + $0x118] sm:$0xf] %vm2016, %v1830
      %2088 = vst.msk [vmem:[%s172 + $0x11c] sm:$0xf] %vm2016, %v1831
      %2089 = vst.msk [vmem:[%s172 + $0x120] sm:$0xf] %vm2016, %v1832
      %2090 = vst.msk [vmem:[%s172 + $0x124] sm:$0xf] %vm2016, %v1833
      %2091 = vst.msk [vmem:[%s172 + $0x128] sm:$0xf] %vm2016, %v1834
      %2092 = vst.msk [vmem:[%s172 + $0x12c] sm:$0xf] %vm2016, %v1835
      %2093 = vst.msk [vmem:[%s172 + $0x130] sm:$0xf] %vm2016, %v1836
      %2094 = vst.msk [vmem:[%s172 + $0x134] sm:$0xf] %vm2016, %v1837
      %2095 = vst.msk [vmem:[%s172 + $0x138] sm:$0xf] %vm2016, %v1838
      %2096 = vst.msk [vmem:[%s172 + $0x13c] sm:$0xf] %vm2016, %v1839
      %2097 = vst.msk [vmem:[%s172 + $0x140] sm:$0xf] %vm2016, %v1840
      %2098 = vst.msk [vmem:[%s172 + $0x144] sm:$0xf] %vm2016, %v1841
      %2099 = vst.msk [vmem:[%s172 + $0x148] sm:$0xf] %vm2016, %v1842
      %2100 = vst.msk [vmem:[%s172 + $0x14c] sm:$0xf] %vm2016, %v1843
      %2101 = vst.msk [vmem:[%s172 + $0x150] sm:$0xf] %vm2016, %v1844
      %2102 = vst.msk [vmem:[%s172 + $0x154] sm:$0xf] %vm2016, %v1845
      %2103 = vst.msk [vmem:[%s172 + $0x158] sm:$0xf] %vm2016, %v1846
      %2104 = vst.msk [vmem:[%s172 + $0x15c] sm:$0xf] %vm2016, %v1847
      %2105 = vst.msk [vmem:[%s172 + $0x160] sm:$0xf] %vm2016, %v1848
      %2106 = vst.msk [vmem:[%s172 + $0x164] sm:$0xf] %vm2016, %v1849
      %2107 = vst.msk [vmem:[%s172 + $0x168] sm:$0xf] %vm2016, %v1850
      %2108 = vst.msk [vmem:[%s172 + $0x16c] sm:$0xf] %vm2016, %v1851
      %2109 = vst.msk [vmem:[%s172 + $0x170] sm:$0xf] %vm2016, %v1852
      %2110 = vst.msk [vmem:[%s172 + $0x174] sm:$0xf] %vm2016, %v1853
      %2111 = vst.msk [vmem:[%s172 + $0x178] sm:$0xf] %vm2016, %v1854
      %2112 = vst.msk [vmem:[%s172 + $0x17c] sm:$0xf] %vm2016, %v1855
      %2113 = vst.msk [vmem:[%s172 + $0x180] sm:$0xf] %vm2016, %v1856
      %2114 = vst.msk [vmem:[%s172 + $0x184] sm:$0xf] %vm2016, %v1857
      %2115 = vst.msk [vmem:[%s172 + $0x188] sm:$0xf] %vm2016, %v1858
      %2116 = vst.msk [vmem:[%s172 + $0x18c] sm:$0xf] %vm2016, %v1859
      %2117 = vst.msk [vmem:[%s172 + $0x190] sm:$0xf] %vm2016, %v1860
      %2118 = vst.msk [vmem:[%s172 + $0x194] sm:$0xf] %vm2016, %v1861
      %2119 = vst.msk [vmem:[%s172 + $0x198] sm:$0xf] %vm2016, %v1862
      %2120 = vst.msk [vmem:[%s172 + $0x19c] sm:$0xf] %vm2016, %v1863
      %2121 = vst.msk [vmem:[%s172 + $0x1a0] sm:$0xf] %vm2016, %v1864
      %2122 = vst.msk [vmem:[%s172 + $0x1a4] sm:$0xf] %vm2016, %v1865
      %2123 = vst.msk [vmem:[%s172 + $0x1a8] sm:$0xf] %vm2016, %v1866
      %2124 = vst.msk [vmem:[%s172 + $0x1ac] sm:$0xf] %vm2016, %v1867
      %2125 = vst.msk [vmem:[%s172 + $0x1b0] sm:$0xf] %vm2016, %v1868
      %2126 = vst.msk [vmem:[%s172 + $0x1b4] sm:$0xf] %vm2016, %v1869
      %2127 = vst.msk [vmem:[%s172 + $0x1b8] sm:$0xf] %vm2016, %v1870
      %2128 = vst.msk [vmem:[%s172 + $0x1bc] sm:$0xf] %vm2016, %v1871
      %2129 = vst.msk [vmem:[%s172 + $0x1c0] sm:$0xf] %vm2016, %v1872
      %2130 = vst.msk [vmem:[%s172 + $0x1c4] sm:$0xf] %vm2016, %v1873
      %2131 = vst.msk [vmem:[%s172 + $0x1c8] sm:$0xf] %vm2016, %v1874
      %2132 = vst.msk [vmem:[%s172 + $0x1cc] sm:$0xf] %vm2016, %v1875
      %2133 = vst.msk [vmem:[%s172 + $0x1d0] sm:$0xf] %vm2016, %v1876
      %2134 = vst.msk [vmem:[%s172 + $0x1d4] sm:$0xf] %vm2016, %v1877
      %2135 = vst.msk [vmem:[%s172 + $0x1d8] sm:$0xf] %vm2016, %v1878
      %2136 = vst.msk [vmem:[%s172 + $0x1dc] sm:$0xf] %vm2016, %v1879
      %2137 = vst.msk [vmem:[%s172 + $0x1e0] sm:$0xf] %vm2016, %v1880
      %2138 = vst.msk [vmem:[%s172 + $0x1e4] sm:$0xf] %vm2016, %v1881
      %2139 = vst.msk [vmem:[%s172 + $0x1e8] sm:$0xf] %vm2016, %v1882
      %2140 = vst.msk [vmem:[%s172 + $0x1ec] sm:$0xf] %vm2016, %v1883
      %2141 = vst.msk [vmem:[%s172 + $0x1f0] sm:$0xf] %vm2016, %v1884
      %2142 = vst.msk [vmem:[%s172 + $0x1f4] sm:$0xf] %vm2016, %v1885
      %2143 = vst.msk [vmem:[%s172 + $0x1f8] sm:$0xf] %vm2016, %v1886
      %2144 = vst.msk [vmem:[%s172 + $0x1fc] sm:$0xf] %vm2016, %v1887
      %s2145 = smul.u32 128, %s14
      %p2146 = scmp.lt.s32.totalorder %s2145, 1023
      %s2147 = scalar_select %p2146, %s2145, 1023
      %s2148 = smul.addr %s2147, 4
      %s2149 = scalar_lea.vmem %s3, %s2148
      // Predicated region
      $region33: #{tpu_custom_call.1} parent=31 // pred_check
        %p2150 = pneg %p100
      $region34: #{tpu_custom_call.1} parent=31 // pred_check_branch
        %2152 = sbr.rel (%p2150) target = $region36
      $region35: #{tpu_custom_call.1} parent=31 // pred_region
        %s2153 = smul.u32 128, %s14
      $region36: #{tpu_custom_call.1} parent=31 // pred_fallthru
        _
    $region32: #{tpu_custom_call.1} parent=5 // pred_fallthru
      _
    %p2154 = scmp.le.s32.totalorder 2, %s9
    // Predicated region
    $region37: #{tpu_custom_call.1} parent=5 // pred_check
      %p2155 = pneg %p2154
    $region38: #{tpu_custom_call.1} parent=5 // pred_check_branch
      %2157 = sbr.rel (%p2155) target = $region40
    $region39: #{tpu_custom_call.1} parent=5 // pred_region
      %s2158 = ssub.s32 %s9, 2
      // Predicated region
      $region41: #{tpu_custom_call.1} parent=39 // pred_check
        %p2159 = pneg %p106
      $region42: #{tpu_custom_call.1} parent=39 // pred_check_branch
        %2161 = sbr.rel (%p2159) target = $region44
      $region43: #{tpu_custom_call.1} parent=39 // pred_region
        %s2162 = smul.u32 128, %s15
        %p2163 = scmp.lt.s32.totalorder %s2162, 1023
        %s2164 = scalar_select %p2163, %s2162, 1023
        %s2165 = smul.addr %s2164, 4
        %s2166 = scalar_lea.vmem %s3, %s2165
      $region44: #{tpu_custom_call.1} parent=39 // pred_fallthru
        _
    $region40: #{tpu_custom_call.1} parent=5 // pred_fallthru
      _
  $region6: #{tpu_custom_call.1} parent=0 // loop_footer
    %s13 = sadd.s32 1, %s9
  $region7: #{tpu_custom_call.1} parent=0 // loop_footer_branch
    %8 = sbr.rel target = $region3
  $region8: #{tpu_custom_call.1} parent=0 // loop_exit
    _

</llo_original>
